<compile_context>
chip_gen: v7x
topology: tpu7x:2x2x1
jax: 0.10.0
libtpu: 0.0.40
codegen_flags: <defaults>
</compile_context>

<pallas_src>
import math

import numpy as np
import jax
import jax.numpy as jnp
from jax.experimental import pallas as pl
from jax.experimental.pallas import tpu as pltpu

# ---- small config consistent with the module's forward ----------------------
B, S = 2, 8              # batch, seq
D = 32                   # d_model
H = 4                    # num_heads
G = 1                    # num_query_groups
HD = D // H              # head_dim = 8
HPG = H // G             # heads per query group
F = 64                   # d_ff
L = 2                    # num_layers
ROPE_BASE = 10000.0
EPS = 1e-6
SCALE = HD ** -0.5
QKV_COLS = 5 * D         # q | k | v | rotate_half(q) | rotate_half(k)  (160)
QKV_PAD = 256            # padded to a 256-lane multiple (v6e/v7x MXU width)


# ---- the kernel --------------------------------------------------------------
def deepseek_kernel(x_ref, cos_ref, sin_ref, nf_ref,
                    n1_ref, wqkv_ref, bqkv_ref, wo_ref, bo_ref,
                    n2_ref, w12_ref, b12_ref, w3_ref, b3_ref,
                    o_ref, x_state):
    l = pl.program_id(1)                                       # layer index (inner axis)

    @pl.when(l == 0)
    def _():
        x_state[...] = x_ref[...]

    x = x_state[...]                                           # (S, D) f32, this batch tile

    def rmsnorm(t, g):                                         # g broadcastable (1, D)
        return t * jax.lax.rsqrt(jnp.mean(t * t, axis=-1, keepdims=True) + EPS) * g

    # ---- pre-norm 1 ----
    xn = rmsnorm(x, n1_ref[0])

    # ---- fused [q|k|v|rot(q)|rot(k)] projection: ONE lane-dense bf16 matmul ----
    qkv = jnp.dot(xn.astype(jnp.bfloat16), wqkv_ref[0],
                  preferred_element_type=jnp.float32) + bqkv_ref[0]

    # ---- RoPE: rotate_half folded into the weights -> pure VPU mul-add ----
    cos = cos_ref[...]                                         # (S, D)
    sin = sin_ref[...]
    q = qkv[:, 0 * D:1 * D] * cos + qkv[:, 3 * D:4 * D] * sin  # GQA-expanded q
    k = qkv[:, 1 * D:2 * D] * cos + qkv[:, 4 * D:5 * D] * sin
    v = qkv[:, 2 * D:3 * D]

    # ---- attention: bf16 MXU matmuls, f32 accumulation, exact f32 softmax ----
    # Each head is accumulated straight through its out-proj row block so no
    # lane-concat / ctx relayout is ever materialized.
    qb = q.astype(jnp.bfloat16)
    kb = k.astype(jnp.bfloat16)
    vb = v.astype(jnp.bfloat16)
    wo = wo_ref[0]                                             # (D, D) bf16
    attn = jnp.zeros((S, D), jnp.float32)
    for h in range(H):                                         # small static unroll (H=4)
        lo = h * HD
        sc = jax.lax.dot_general(                              # q @ k^T, bf16 -> f32
            qb[:, lo:lo + HD], kb[:, lo:lo + HD],
            (((1,), (1,)), ((), ())),
            preferred_element_type=jnp.float32) * SCALE
        sc = sc - jnp.max(sc, axis=-1, keepdims=True)
        e = jnp.exp(sc)
        p = e / jnp.sum(e, axis=-1, keepdims=True)             # exact softmax
        ctx = jnp.dot(p.astype(jnp.bfloat16), vb[:, lo:lo + HD],
                      preferred_element_type=jnp.float32)
        attn = attn + jnp.dot(ctx.astype(jnp.bfloat16), wo[lo:lo + HD, :],
                              preferred_element_type=jnp.float32)
    x2 = x + attn + bo_ref[0]                                  # residual + out-proj bias

    # ---- pre-norm 2 + SwiGLU (fused w1|w2, 128-lane-dense) + residual ----
    xn2 = rmsnorm(x2, n2_ref[0])
    h12 = jnp.dot(xn2.astype(jnp.bfloat16), w12_ref[0],
                  preferred_element_type=jnp.float32) + b12_ref[0]
    swish = h12[:, :F] * jax.nn.sigmoid(h12[:, F:2 * F])
    ff = jnp.dot(swish.astype(jnp.bfloat16), w3_ref[0],
                 preferred_element_type=jnp.float32) + b3_ref[0]
    x3 = x2 + ff

    x_state[...] = x3                                          # carry to next layer

    # ---- final RMSNorm, written once on the last layer ----
    @pl.when(l == pl.num_programs(1) - 1)
    def _():
        o_ref[...] = rmsnorm(x3, nf_ref[...]).astype(o_ref.dtype)


# ---- host-side constant builders ---------------------------------------------
def rope_tables():
    inv_freq = 1.0 / (ROPE_BASE ** (np.arange(0, HD, 2, dtype=np.float32) / HD))
    freqs = np.outer(np.arange(S, dtype=np.float32), inv_freq)      # (S, HD/2)
    emb = np.concatenate([freqs, freqs], axis=-1)                   # (S, HD)
    cos = np.tile(np.cos(emb), (1, H)).astype(np.float32)           # (S, D): same per head
    sin = np.tile(np.sin(emb), (1, H)).astype(np.float32)
    return jnp.asarray(cos), jnp.asarray(sin)


def rotate_half_matrix():
    # y = x @ R gives per-head rotate_half: y[:half] = -x[half:], y[half:] = x[:half]
    R = np.zeros((D, D), np.float32)
    half = HD // 2
    for h in range(H):
        base = h * HD
        for j in range(half):
            R[base + j + half, base + j] = -1.0
            R[base + j, base + j + half] = 1.0
    return jnp.asarray(R)


def group_expand_matrix():
    # E maps grouped q columns to per-head columns (repeat_interleave over heads)
    E = np.zeros((G * HD, D), np.float32)
    for h in range(H):
        g = h // HPG
        for d in range(HD):
            E[g * HD + d, h * HD + d] = 1.0
    return jnp.asarray(E)


# ---- parameters --------------------------------------------------------------
def init_params(key):
    def linear(k, fan_in, fan_out):
        bound = 1.0 / math.sqrt(fan_in)
        kw, kb = jax.random.split(k)
        w = jax.random.uniform(kw, (fan_in, fan_out), jnp.float32, -bound, bound)
        b = jax.random.uniform(kb, (fan_out,), jnp.float32, -bound, bound)
        return w, b

    keys = jax.random.split(key, L)
    layers = []
    for li in range(L):
        ks = jax.random.split(keys[li], 7)
        lp = {}
        lp['wq'], lp['bq'] = linear(ks[0], D, G * HD)
        lp['wk'], lp['bk'] = linear(ks[1], D, D)
        lp['wv'], lp['bv'] = linear(ks[2], D, D)
        lp['wo'], lp['bo'] = linear(ks[3], D, D)
        lp['w1'], lp['b1'] = linear(ks[4], D, F)
        lp['w2'], lp['b2'] = linear(ks[5], D, F)
        lp['w3'], lp['b3'] = linear(ks[6], F, D)
        lp['n1'] = jnp.ones((D,), jnp.float32)
        lp['n2'] = jnp.ones((D,), jnp.float32)
        layers.append(lp)
    nf = jnp.ones((D,), jnp.float32)
    return layers, nf


def pack_params(layers, nf):
    E = group_expand_matrix()
    R = rotate_half_matrix()
    wqkv, bqkv, wo, bo, w12, b12, w3, b3, n1, n2 = ([] for _ in range(10))
    wpad = jnp.zeros((D, QKV_PAD - QKV_COLS), jnp.float32)
    bpad = jnp.zeros((QKV_PAD - QKV_COLS,), jnp.float32)
    for lp in layers:
        wq_e = lp['wq'] @ E                     # fold GQA group-expansion (exact, f32)
        bq_e = lp['bq'] @ E
        # fold rotate_half into extra output columns (exact, f32, host-side)
        wqkv.append(jnp.concatenate(
            [wq_e, lp['wk'], lp['wv'], wq_e @ R, lp['wk'] @ R, wpad], axis=1))
        bqkv.append(jnp.concatenate(
            [bq_e, lp['bk'], lp['bv'], bq_e @ R, lp['bk'] @ R, bpad]))
        wo.append(lp['wo']); bo.append(lp['bo'])
        w12.append(jnp.concatenate([lp['w1'], lp['w2']], axis=1))
        b12.append(jnp.concatenate([lp['b1'], lp['b2']]))
        w3.append(lp['w3']); b3.append(lp['b3'])
        n1.append(lp['n1']); n2.append(lp['n2'])

    stack_w = lambda ws: jnp.stack(ws).astype(jnp.bfloat16)   # (L, in, out) bf16
    stack_b = lambda bs: jnp.stack(bs)[:, None, :]            # (L, 1, out)  f32

    return dict(
        wqkv=stack_w(wqkv), bqkv=stack_b(bqkv),
        wo=stack_w(wo), bo=stack_b(bo),
        w12=stack_w(w12), b12=stack_b(b12),
        w3=stack_w(w3), b3=stack_b(b3),
        n1=stack_b(n1), n2=stack_b(n2),
        nf=nf[None, :],
    )


# ---- wrapper -----------------------------------------------------------------
def deepseek_transformer(x, packed, rope_cos, rope_sin):
    xf = x.reshape(B * S, D)

    row_tile = lambda b, l: (b, 0)          # per-batch activation / output tile
    shared = lambda b, l: (0, 0)            # batch/layer-invariant constants
    per_layer = lambda b, l: (l, 0, 0)      # streamed per-layer weights

    in_specs = [
        pl.BlockSpec((S, D), row_tile),             # x
        pl.BlockSpec((S, D), shared),               # rope cos
        pl.BlockSpec((S, D), shared),               # rope sin
        pl.BlockSpec((1, D), shared),               # final norm weight
        pl.BlockSpec((1, 1, D), per_layer),         # n1
        pl.BlockSpec((1, D, QKV_PAD), per_layer),   # wqkv (bf16, rot folded)
        pl.BlockSpec((1, 1, QKV_PAD), per_layer),   # bqkv
        pl.BlockSpec((1, D, D), per_layer),         # wo (bf16)
        pl.BlockSpec((1, 1, D), per_layer),         # bo
        pl.BlockSpec((1, 1, D), per_layer),         # n2
        pl.BlockSpec((1, D, 2 * F), per_layer),     # w12 (bf16)
        pl.BlockSpec((1, 1, 2 * F), per_layer),     # b12
        pl.BlockSpec((1, F, D), per_layer),         # w3 (bf16)
        pl.BlockSpec((1, 1, D), per_layer),         # b3
    ]

    out = pl.pallas_call(
        deepseek_kernel,
        out_shape=jax.ShapeDtypeStruct((B * S, D), jnp.float32),
        grid=(B, L),                                # batch (parallel) x layers (carry)
        in_specs=in_specs,
        out_specs=pl.BlockSpec((S, D), row_tile),
        scratch_shapes=[pltpu.VMEM((S, D), jnp.float32)],
        compiler_params=pltpu.CompilerParams(
            dimension_semantics=("parallel", "arbitrary"),
            vmem_limit_bytes=32 * 1024 * 1024),
    )(xf, rope_cos, rope_sin, packed['nf'],
      packed['n1'], packed['wqkv'], packed['bqkv'],
      packed['wo'], packed['bo'],
      packed['n2'], packed['w12'], packed['b12'],
      packed['w3'], packed['b3'])
    return out.reshape(B, S, D)


# ---- pure-JAX reference (mirrors the PyTorch forward) --------------------------
def reference(x, layers, nf):
    def rmsnorm(t, w):
        return w * t * jax.lax.rsqrt(jnp.mean(t * t, -1, keepdims=True) + EPS)

    def rotate_half(t):
        t1, t2 = jnp.split(t, 2, axis=-1)
        return jnp.concatenate([-t2, t1], axis=-1)

    inv_freq = 1.0 / (ROPE_BASE ** (jnp.arange(0, HD, 2, dtype=jnp.float32) / HD))
    freqs = jnp.outer(jnp.arange(S, dtype=jnp.float32), inv_freq)
    emb = jnp.concatenate([freqs, freqs], axis=-1)
    cos = jnp.cos(emb)[None, :, None, :]                # (1, S, 1, HD)
    sin = jnp.sin(emb)[None, :, None, :]

    for lp in layers:
        xn = rmsnorm(x, lp['n1'])
        q = (xn @ lp['wq'] + lp['bq']).reshape(B, S, G, HD)
        k = (xn @ lp['wk'] + lp['bk']).reshape(B, S, H, HD)
        v = (xn @ lp['wv'] + lp['bv']).reshape(B, S, H, HD)
        q = jnp.repeat(q, HPG, axis=2)                  # repeat_interleave over heads
        q = q * cos + rotate_half(q) * sin
        k = k * cos + rotate_half(k) * sin
        sc = jnp.einsum('bihd,bjhd->bhij', q, k) * SCALE
        attn = jax.nn.softmax(sc, axis=-1)
        ctx = jnp.einsum('bhij,bjhd->bihd', attn, v).reshape(B, S, D)
        x = x + (ctx @ lp['wo'] + lp['bo'])
        xn2 = rmsnorm(x, lp['n2'])
        h1 = xn2 @ lp['w1'] + lp['b1']
        h2 = xn2 @ lp['w2'] + lp['b2']
        x = x + ((h1 * jax.nn.sigmoid(h2)) @ lp['w3'] + lp['b3'])
    return rmsnorm(x, nf)


if __name__ == "__main__":
    key = jax.random.PRNGKey(0)
    kx, kp = jax.random.split(key)

    x = jax.random.normal(kx, (B, S, D), jnp.float32)
    layers, nf = init_params(kp)

    packed = pack_params(layers, nf)
    rope_cos, rope_sin = rope_tables()

    run = jax.jit(lambda xx: deepseek_transformer(xx, packed, rope_cos, rope_sin))
    out = jax.block_until_ready(run(x))

    ref = reference(x, layers, nf)
    assert out.shape == (B, S, D)
    err = float(jnp.max(jnp.abs(out - ref)))
    # bf16 weights + bf16 attention operands across 2 layers -> loose tolerance vs f32 ref
    assert jnp.allclose(out, ref, rtol=5e-2, atol=5e-2), f"max abs err {err}"

    print("KERNEL_OK")
</pallas_src>

<mosaic_0001>
module attributes {stable_mosaic.version = 11 : i64} {
  func.func @deepseek_kernel(%arg0: i32, %arg1: i32, %arg2: memref<8x32xf32, #tpu.memory_space<vmem>>, %arg3: memref<8x32xf32, #tpu.memory_space<vmem>>, %arg4: memref<8x32xf32, #tpu.memory_space<vmem>>, %arg5: memref<1x32xf32, #tpu.memory_space<vmem>>, %arg6: memref<1x1x32xf32, #tpu.memory_space<vmem>>, %arg7: memref<1x32x256xbf16, #tpu.memory_space<vmem>>, %arg8: memref<1x1x256xf32, #tpu.memory_space<vmem>>, %arg9: memref<1x32x32xbf16, #tpu.memory_space<vmem>>, %arg10: memref<1x1x32xf32, #tpu.memory_space<vmem>>, %arg11: memref<1x1x32xf32, #tpu.memory_space<vmem>>, %arg12: memref<1x32x128xbf16, #tpu.memory_space<vmem>>, %arg13: memref<1x1x128xf32, #tpu.memory_space<vmem>>, %arg14: memref<1x64x32xbf16, #tpu.memory_space<vmem>>, %arg15: memref<1x1x32xf32, #tpu.memory_space<vmem>>, %arg16: memref<8x32xf32, #tpu.memory_space<vmem>>, %arg17: memref<8x32xf32, #tpu.memory_space<vmem>>) attributes {dimension_semantics = [#tpu.dimension_semantics<parallel>, #tpu.dimension_semantics<arbitrary>], iteration_bounds = array<i64: 2, 2>, scalar_prefetch = 0 : i64, scratch_operands = 1 : i64, tpu.core_type = #tpu.core_type<tc>, window_params = [{transform_indices = @transform_0, window_bounds = array<i64: 8, 32>}, {pipeline_mode = #tpu.pipeline_mode<synchronous>, transform_indices = @transform_1, window_bounds = array<i64: 8, 32>}, {pipeline_mode = #tpu.pipeline_mode<synchronous>, transform_indices = @transform_2, window_bounds = array<i64: 8, 32>}, {pipeline_mode = #tpu.pipeline_mode<synchronous>, transform_indices = @transform_3, window_bounds = array<i64: 1, 32>}, {transform_indices = @transform_4, window_bounds = array<i64: 1, 1, 32>}, {transform_indices = @transform_5, window_bounds = array<i64: 1, 32, 256>}, {transform_indices = @transform_6, window_bounds = array<i64: 1, 1, 256>}, {transform_indices = @transform_7, window_bounds = array<i64: 1, 32, 32>}, {transform_indices = @transform_8, window_bounds = array<i64: 1, 1, 32>}, {transform_indices = @transform_9, window_bounds = array<i64: 1, 1, 32>}, {transform_indices = @transform_10, window_bounds = array<i64: 1, 32, 128>}, {transform_indices = @transform_11, window_bounds = array<i64: 1, 1, 128>}, {transform_indices = @transform_12, window_bounds = array<i64: 1, 64, 32>}, {transform_indices = @transform_13, window_bounds = array<i64: 1, 1, 32>}, {transform_indices = @transform_14, window_bounds = array<i64: 8, 32>}]} {
    %c0_i32 = arith.constant 0 : i32
    %0 = arith.cmpi eq, %arg1, %c0_i32 : i32
    %1 = arith.extui %0 : i1 to i32
    %c0_i32_0 = arith.constant 0 : i32
    %2 = arith.cmpi ne, %1, %c0_i32_0 : i32
    scf.if %2 {
      %c0_73 = arith.constant 0 : index
      %c0_74 = arith.constant 0 : index
      %177 = vector.load %arg2[%c0_73, %c0_74] : memref<8x32xf32, #tpu.memory_space<vmem>>, vector<8x32xf32>
      %c0_75 = arith.constant 0 : index
      %c0_76 = arith.constant 0 : index
      %178 = vector.load %arg17[%c0_75, %c0_76] : memref<8x32xf32, #tpu.memory_space<vmem>>, vector<8x32xf32>
      tpu.vector_store %arg17[%c0_75, %c0_76], %177 {strides = array<i32>} : memref<8x32xf32, #tpu.memory_space<vmem>>, vector<8x32xf32>,
    } else {
    }
    %c0 = arith.constant 0 : index
    %c0_1 = arith.constant 0 : index
    %3 = vector.load %arg17[%c0, %c0_1] : memref<8x32xf32, #tpu.memory_space<vmem>>, vector<8x32xf32>
    %c0_2 = arith.constant 0 : index
    %c0_3 = arith.constant 0 : index
    %c0_4 = arith.constant 0 : index
    %4 = vector.load %arg6[%c0_2, %c0_3, %c0_4] : memref<1x1x32xf32, #tpu.memory_space<vmem>>, vector<1x1x32xf32>
    %5 = vector.shape_cast %4 : vector<1x1x32xf32> to vector<1x32xf32>
    %6 = arith.mulf %3, %3 : vector<8x32xf32>
    %cst = arith.constant dense<0.000000e+00> : vector<8xf32>
    %7 = vector.multi_reduction <add>, %6, %cst [1] : vector<8x32xf32> to vector<8xf32>
    %8 = vector.shape_cast %7 : vector<8xf32> to vector<8x1xf32>
    %cst_5 = arith.constant 3.200000e+01 : f32
    %9 = vector.broadcast %cst_5 : f32 to vector<8x1xf32>
    %10 = arith.divf %8, %9 : vector<8x1xf32>
    %cst_6 = arith.constant 9.99999997E-7 : f32
    %11 = vector.broadcast %cst_6 : f32 to vector<8x1xf32>
    %12 = arith.addf %10, %11 : vector<8x1xf32>
    %13 = math.rsqrt %12 : vector<8x1xf32>
    %14 = vector.broadcast %13 : vector<8x1xf32> to vector<8x32xf32>
    %15 = arith.mulf %3, %14 : vector<8x32xf32>
    %16 = vector.broadcast %5 : vector<1x32xf32> to vector<8x32xf32>
    %17 = arith.mulf %15, %16 : vector<8x32xf32>
    %18 = arith.truncf %17 : vector<8x32xf32> to vector<8x32xbf16>
    %c0_7 = arith.constant 0 : index
    %c0_8 = arith.constant 0 : index
    %c0_9 = arith.constant 0 : index
    %19 = vector.load %arg7[%c0_7, %c0_8, %c0_9] : memref<1x32x256xbf16, #tpu.memory_space<vmem>>, vector<1x32x256xbf16>
    %20 = vector.shape_cast %19 : vector<1x32x256xbf16> to vector<32x256xbf16>
    %cst_10 = arith.constant dense<0.000000e+00> : vector<8x256xf32>
    %21 = tpu.matmul %18, %20, %cst_10 {dimension_numbers = #tpu.dot_dimension_numbers<[1], [0], [0], [1], [0, 0, 1, 1], [], []>} : vector<8x32xbf16>, vector<32x256xbf16>, vector<8x256xf32> -> vector<8x256xf32>
    %c0_11 = arith.constant 0 : index
    %c0_12 = arith.constant 0 : index
    %c0_13 = arith.constant 0 : index
    %22 = vector.load %arg8[%c0_11, %c0_12, %c0_13] : memref<1x1x256xf32, #tpu.memory_space<vmem>>, vector<1x1x256xf32>
    %23 = vector.shape_cast %22 : vector<1x1x256xf32> to vector<1x256xf32>
    %24 = vector.broadcast %23 : vector<1x256xf32> to vector<8x256xf32>
    %25 = arith.addf %21, %24 : vector<8x256xf32>
    %c0_14 = arith.constant 0 : index
    %c0_15 = arith.constant 0 : index
    %26 = vector.load %arg3[%c0_14, %c0_15] : memref<8x32xf32, #tpu.memory_space<vmem>>, vector<8x32xf32>
    %c0_16 = arith.constant 0 : index
    %c0_17 = arith.constant 0 : index
    %27 = vector.load %arg4[%c0_16, %c0_17] : memref<8x32xf32, #tpu.memory_space<vmem>>, vector<8x32xf32>
    %28 = vector.extract_strided_slice %25 {offsets = [0, 0], sizes = [8, 32], strides = [1, 1]} : vector<8x256xf32> to vector<8x32xf32>
    %29 = arith.mulf %28, %26 : vector<8x32xf32>
    %30 = vector.extract_strided_slice %25 {offsets = [0, 96], sizes = [8, 32], strides = [1, 1]} : vector<8x256xf32> to vector<8x32xf32>
    %31 = arith.mulf %30, %27 : vector<8x32xf32>
    %32 = arith.addf %29, %31 : vector<8x32xf32>
    %33 = vector.extract_strided_slice %25 {offsets = [0, 32], sizes = [8, 32], strides = [1, 1]} : vector<8x256xf32> to vector<8x32xf32>
    %34 = arith.mulf %33, %26 : vector<8x32xf32>
    %35 = vector.extract_strided_slice %25 {offsets = [0, 128], sizes = [8, 32], strides = [1, 1]} : vector<8x256xf32> to vector<8x32xf32>
    %36 = arith.mulf %35, %27 : vector<8x32xf32>
    %37 = arith.addf %34, %36 : vector<8x32xf32>
    %38 = vector.extract_strided_slice %25 {offsets = [0, 64], sizes = [8, 32], strides = [1, 1]} : vector<8x256xf32> to vector<8x32xf32>
    %39 = arith.truncf %32 : vector<8x32xf32> to vector<8x32xbf16>
    %40 = arith.truncf %37 : vector<8x32xf32> to vector<8x32xbf16>
    %41 = arith.truncf %38 : vector<8x32xf32> to vector<8x32xbf16>
    %c0_18 = arith.constant 0 : index
    %c0_19 = arith.constant 0 : index
    %c0_20 = arith.constant 0 : index
    %42 = vector.load %arg9[%c0_18, %c0_19, %c0_20] : memref<1x32x32xbf16, #tpu.memory_space<vmem>>, vector<1x32x32xbf16>
    %43 = vector.shape_cast %42 : vector<1x32x32xbf16> to vector<32x32xbf16>
    %cst_21 = arith.constant 0.000000e+00 : f32
    %44 = vector.broadcast %cst_21 : f32 to vector<8x32xf32>
    %45 = vector.extract_strided_slice %39 {offsets = [0, 0], sizes = [8, 8], strides = [1, 1]} : vector<8x32xbf16> to vector<8x8xbf16>
    %46 = vector.extract_strided_slice %40 {offsets = [0, 0], sizes = [8, 8], strides = [1, 1]} : vector<8x32xbf16> to vector<8x8xbf16>
    %cst_22 = arith.constant dense<0.000000e+00> : vector<8x8xf32>
    %47 = tpu.matmul %45, %46, %cst_22 {dimension_numbers = #tpu.dot_dimension_numbers<[1], [1], [0], [0], [0, 0, 1, 0], [], []>} : vector<8x8xbf16>, vector<8x8xbf16>, vector<8x8xf32> -> vector<8x8xf32>
    %cst_23 = arith.constant 0.353553385 : f32
    %48 = vector.broadcast %cst_23 : f32 to vector<8x8xf32>
    %49 = arith.mulf %47, %48 : vector<8x8xf32>
    %cst_24 = arith.constant dense<0xFF800000> : vector<8xf32>
    %50 = vector.multi_reduction <maximumf>, %49, %cst_24 [1] : vector<8x8xf32> to vector<8xf32>
    %51 = vector.shape_cast %50 : vector<8xf32> to vector<8x1xf32>
    %52 = vector.broadcast %51 : vector<8x1xf32> to vector<8x8xf32>
    %53 = arith.subf %49, %52 : vector<8x8xf32>
    %54 = math.exp %53 : vector<8x8xf32>
    %cst_25 = arith.constant dense<0.000000e+00> : vector<8xf32>
    %55 = vector.multi_reduction <add>, %54, %cst_25 [1] : vector<8x8xf32> to vector<8xf32>
    %56 = vector.shape_cast %55 : vector<8xf32> to vector<8x1xf32>
    %57 = vector.broadcast %56 : vector<8x1xf32> to vector<8x8xf32>
    %58 = arith.divf %54, %57 : vector<8x8xf32>
    %59 = arith.truncf %58 : vector<8x8xf32> to vector<8x8xbf16>
    %60 = vector.extract_strided_slice %41 {offsets = [0, 0], sizes = [8, 8], strides = [1, 1]} : vector<8x32xbf16> to vector<8x8xbf16>
    %cst_26 = arith.constant dense<0.000000e+00> : vector<8x8xf32>
    %61 = tpu.matmul %59, %60, %cst_26 {dimension_numbers = #tpu.dot_dimension_numbers<[1], [0], [0], [1], [0, 0, 1, 1], [], []>} : vector<8x8xbf16>, vector<8x8xbf16>, vector<8x8xf32> -> vector<8x8xf32>
    %62 = arith.truncf %61 : vector<8x8xf32> to vector<8x8xbf16>
    %63 = vector.extract_strided_slice %43 {offsets = [0, 0], sizes = [8, 32], strides = [1, 1]} : vector<32x32xbf16> to vector<8x32xbf16>
    %cst_27 = arith.constant dense<0.000000e+00> : vector<8x32xf32>
    %64 = tpu.matmul %62, %63, %cst_27 {dimension_numbers = #tpu.dot_dimension_numbers<[1], [0], [0], [1], [0, 0, 1, 1], [], []>} : vector<8x8xbf16>, vector<8x32xbf16>, vector<8x32xf32> -> vector<8x32xf32>
    %65 = arith.addf %44, %64 : vector<8x32xf32>
    %66 = vector.extract_strided_slice %39 {offsets = [0, 8], sizes = [8, 8], strides = [1, 1]} : vector<8x32xbf16> to vector<8x8xbf16>
    %67 = vector.extract_strided_slice %40 {offsets = [0, 8], sizes = [8, 8], strides = [1, 1]} : vector<8x32xbf16> to vector<8x8xbf16>
    %cst_28 = arith.constant dense<0.000000e+00> : vector<8x8xf32>
    %68 = tpu.matmul %66, %67, %cst_28 {dimension_numbers = #tpu.dot_dimension_numbers<[1], [1], [0], [0], [0, 0, 1, 0], [], []>} : vector<8x8xbf16>, vector<8x8xbf16>, vector<8x8xf32> -> vector<8x8xf32>
    %cst_29 = arith.constant 0.353553385 : f32
    %69 = vector.broadcast %cst_29 : f32 to vector<8x8xf32>
    %70 = arith.mulf %68, %69 : vector<8x8xf32>
    %cst_30 = arith.constant dense<0xFF800000> : vector<8xf32>
    %71 = vector.multi_reduction <maximumf>, %70, %cst_30 [1] : vector<8x8xf32> to vector<8xf32>
    %72 = vector.shape_cast %71 : vector<8xf32> to vector<8x1xf32>
    %73 = vector.broadcast %72 : vector<8x1xf32> to vector<8x8xf32>
    %74 = arith.subf %70, %73 : vector<8x8xf32>
    %75 = math.exp %74 : vector<8x8xf32>
    %cst_31 = arith.constant dense<0.000000e+00> : vector<8xf32>
    %76 = vector.multi_reduction <add>, %75, %cst_31 [1] : vector<8x8xf32> to vector<8xf32>
    %77 = vector.shape_cast %76 : vector<8xf32> to vector<8x1xf32>
    %78 = vector.broadcast %77 : vector<8x1xf32> to vector<8x8xf32>
    %79 = arith.divf %75, %78 : vector<8x8xf32>
    %80 = arith.truncf %79 : vector<8x8xf32> to vector<8x8xbf16>
    %81 = vector.extract_strided_slice %41 {offsets = [0, 8], sizes = [8, 8], strides = [1, 1]} : vector<8x32xbf16> to vector<8x8xbf16>
    %cst_32 = arith.constant dense<0.000000e+00> : vector<8x8xf32>
    %82 = tpu.matmul %80, %81, %cst_32 {dimension_numbers = #tpu.dot_dimension_numbers<[1], [0], [0], [1], [0, 0, 1, 1], [], []>} : vector<8x8xbf16>, vector<8x8xbf16>, vector<8x8xf32> -> vector<8x8xf32>
    %83 = arith.truncf %82 : vector<8x8xf32> to vector<8x8xbf16>
    %84 = vector.extract_strided_slice %43 {offsets = [8, 0], sizes = [8, 32], strides = [1, 1]} : vector<32x32xbf16> to vector<8x32xbf16>
    %cst_33 = arith.constant dense<0.000000e+00> : vector<8x32xf32>
    %85 = tpu.matmul %83, %84, %cst_33 {dimension_numbers = #tpu.dot_dimension_numbers<[1], [0], [0], [1], [0, 0, 1, 1], [], []>} : vector<8x8xbf16>, vector<8x32xbf16>, vector<8x32xf32> -> vector<8x32xf32>
    %86 = arith.addf %65, %85 : vector<8x32xf32>
    %87 = vector.extract_strided_slice %39 {offsets = [0, 16], sizes = [8, 8], strides = [1, 1]} : vector<8x32xbf16> to vector<8x8xbf16>
    %88 = vector.extract_strided_slice %40 {offsets = [0, 16], sizes = [8, 8], strides = [1, 1]} : vector<8x32xbf16> to vector<8x8xbf16>
    %cst_34 = arith.constant dense<0.000000e+00> : vector<8x8xf32>
    %89 = tpu.matmul %87, %88, %cst_34 {dimension_numbers = #tpu.dot_dimension_numbers<[1], [1], [0], [0], [0, 0, 1, 0], [], []>} : vector<8x8xbf16>, vector<8x8xbf16>, vector<8x8xf32> -> vector<8x8xf32>
    %cst_35 = arith.constant 0.353553385 : f32
    %90 = vector.broadcast %cst_35 : f32 to vector<8x8xf32>
    %91 = arith.mulf %89, %90 : vector<8x8xf32>
    %cst_36 = arith.constant dense<0xFF800000> : vector<8xf32>
    %92 = vector.multi_reduction <maximumf>, %91, %cst_36 [1] : vector<8x8xf32> to vector<8xf32>
    %93 = vector.shape_cast %92 : vector<8xf32> to vector<8x1xf32>
    %94 = vector.broadcast %93 : vector<8x1xf32> to vector<8x8xf32>
    %95 = arith.subf %91, %94 : vector<8x8xf32>
    %96 = math.exp %95 : vector<8x8xf32>
    %cst_37 = arith.constant dense<0.000000e+00> : vector<8xf32>
    %97 = vector.multi_reduction <add>, %96, %cst_37 [1] : vector<8x8xf32> to vector<8xf32>
    %98 = vector.shape_cast %97 : vector<8xf32> to vector<8x1xf32>
    %99 = vector.broadcast %98 : vector<8x1xf32> to vector<8x8xf32>
    %100 = arith.divf %96, %99 : vector<8x8xf32>
    %101 = arith.truncf %100 : vector<8x8xf32> to vector<8x8xbf16>
    %102 = vector.extract_strided_slice %41 {offsets = [0, 16], sizes = [8, 8], strides = [1, 1]} : vector<8x32xbf16> to vector<8x8xbf16>
    %cst_38 = arith.constant dense<0.000000e+00> : vector<8x8xf32>
    %103 = tpu.matmul %101, %102, %cst_38 {dimension_numbers = #tpu.dot_dimension_numbers<[1], [0], [0], [1], [0, 0, 1, 1], [], []>} : vector<8x8xbf16>, vector<8x8xbf16>, vector<8x8xf32> -> vector<8x8xf32>
    %104 = arith.truncf %103 : vector<8x8xf32> to vector<8x8xbf16>
    %105 = vector.extract_strided_slice %43 {offsets = [16, 0], sizes = [8, 32], strides = [1, 1]} : vector<32x32xbf16> to vector<8x32xbf16>
    %cst_39 = arith.constant dense<0.000000e+00> : vector<8x32xf32>
    %106 = tpu.matmul %104, %105, %cst_39 {dimension_numbers = #tpu.dot_dimension_numbers<[1], [0], [0], [1], [0, 0, 1, 1], [], []>} : vector<8x8xbf16>, vector<8x32xbf16>, vector<8x32xf32> -> vector<8x32xf32>
    %107 = arith.addf %86, %106 : vector<8x32xf32>
    %108 = vector.extract_strided_slice %39 {offsets = [0, 24], sizes = [8, 8], strides = [1, 1]} : vector<8x32xbf16> to vector<8x8xbf16>
    %109 = vector.extract_strided_slice %40 {offsets = [0, 24], sizes = [8, 8], strides = [1, 1]} : vector<8x32xbf16> to vector<8x8xbf16>
    %cst_40 = arith.constant dense<0.000000e+00> : vector<8x8xf32>
    %110 = tpu.matmul %108, %109, %cst_40 {dimension_numbers = #tpu.dot_dimension_numbers<[1], [1], [0], [0], [0, 0, 1, 0], [], []>} : vector<8x8xbf16>, vector<8x8xbf16>, vector<8x8xf32> -> vector<8x8xf32>
    %cst_41 = arith.constant 0.353553385 : f32
    %111 = vector.broadcast %cst_41 : f32 to vector<8x8xf32>
    %112 = arith.mulf %110, %111 : vector<8x8xf32>
    %cst_42 = arith.constant dense<0xFF800000> : vector<8xf32>
    %113 = vector.multi_reduction <maximumf>, %112, %cst_42 [1] : vector<8x8xf32> to vector<8xf32>
    %114 = vector.shape_cast %113 : vector<8xf32> to vector<8x1xf32>
    %115 = vector.broadcast %114 : vector<8x1xf32> to vector<8x8xf32>
    %116 = arith.subf %112, %115 : vector<8x8xf32>
    %117 = math.exp %116 : vector<8x8xf32>
    %cst_43 = arith.constant dense<0.000000e+00> : vector<8xf32>
    %118 = vector.multi_reduction <add>, %117, %cst_43 [1] : vector<8x8xf32> to vector<8xf32>
    %119 = vector.shape_cast %118 : vector<8xf32> to vector<8x1xf32>
    %120 = vector.broadcast %119 : vector<8x1xf32> to vector<8x8xf32>
    %121 = arith.divf %117, %120 : vector<8x8xf32>
    %122 = arith.truncf %121 : vector<8x8xf32> to vector<8x8xbf16>
    %123 = vector.extract_strided_slice %41 {offsets = [0, 24], sizes = [8, 8], strides = [1, 1]} : vector<8x32xbf16> to vector<8x8xbf16>
    %cst_44 = arith.constant dense<0.000000e+00> : vector<8x8xf32>
    %124 = tpu.matmul %122, %123, %cst_44 {dimension_numbers = #tpu.dot_dimension_numbers<[1], [0], [0], [1], [0, 0, 1, 1], [], []>} : vector<8x8xbf16>, vector<8x8xbf16>, vector<8x8xf32> -> vector<8x8xf32>
    %125 = arith.truncf %124 : vector<8x8xf32> to vector<8x8xbf16>
    %126 = vector.extract_strided_slice %43 {offsets = [24, 0], sizes = [8, 32], strides = [1, 1]} : vector<32x32xbf16> to vector<8x32xbf16>
    %cst_45 = arith.constant dense<0.000000e+00> : vector<8x32xf32>
    %127 = tpu.matmul %125, %126, %cst_45 {dimension_numbers = #tpu.dot_dimension_numbers<[1], [0], [0], [1], [0, 0, 1, 1], [], []>} : vector<8x8xbf16>, vector<8x32xbf16>, vector<8x32xf32> -> vector<8x32xf32>
    %128 = arith.addf %107, %127 : vector<8x32xf32>
    %129 = arith.addf %3, %128 : vector<8x32xf32>
    %c0_46 = arith.constant 0 : index
    %c0_47 = arith.constant 0 : index
    %c0_48 = arith.constant 0 : index
    %130 = vector.load %arg10[%c0_46, %c0_47, %c0_48] : memref<1x1x32xf32, #tpu.memory_space<vmem>>, vector<1x1x32xf32>
    %131 = vector.shape_cast %130 : vector<1x1x32xf32> to vector<1x32xf32>
    %132 = vector.broadcast %131 : vector<1x32xf32> to vector<8x32xf32>
    %133 = arith.addf %129, %132 : vector<8x32xf32>
    %c0_49 = arith.constant 0 : index
    %c0_50 = arith.constant 0 : index
    %c0_51 = arith.constant 0 : index
    %134 = vector.load %arg11[%c0_49, %c0_50, %c0_51] : memref<1x1x32xf32, #tpu.memory_space<vmem>>, vector<1x1x32xf32>
    %135 = vector.shape_cast %134 : vector<1x1x32xf32> to vector<1x32xf32>
    %136 = arith.mulf %133, %133 : vector<8x32xf32>
    %cst_52 = arith.constant dense<0.000000e+00> : vector<8xf32>
    %137 = vector.multi_reduction <add>, %136, %cst_52 [1] : vector<8x32xf32> to vector<8xf32>
    %138 = vector.shape_cast %137 : vector<8xf32> to vector<8x1xf32>
    %cst_53 = arith.constant 3.200000e+01 : f32
    %139 = vector.broadcast %cst_53 : f32 to vector<8x1xf32>
    %140 = arith.divf %138, %139 : vector<8x1xf32>
    %cst_54 = arith.constant 9.99999997E-7 : f32
    %141 = vector.broadcast %cst_54 : f32 to vector<8x1xf32>
    %142 = arith.addf %140, %141 : vector<8x1xf32>
    %143 = math.rsqrt %142 : vector<8x1xf32>
    %144 = vector.broadcast %143 : vector<8x1xf32> to vector<8x32xf32>
    %145 = arith.mulf %133, %144 : vector<8x32xf32>
    %146 = vector.broadcast %135 : vector<1x32xf32> to vector<8x32xf32>
    %147 = arith.mulf %145, %146 : vector<8x32xf32>
    %148 = arith.truncf %147 : vector<8x32xf32> to vector<8x32xbf16>
    %c0_55 = arith.constant 0 : index
    %c0_56 = arith.constant 0 : index
    %c0_57 = arith.constant 0 : index
    %149 = vector.load %arg12[%c0_55, %c0_56, %c0_57] : memref<1x32x128xbf16, #tpu.memory_space<vmem>>, vector<1x32x128xbf16>
    %150 = vector.shape_cast %149 : vector<1x32x128xbf16> to vector<32x128xbf16>
    %cst_58 = arith.constant dense<0.000000e+00> : vector<8x128xf32>
    %151 = tpu.matmul %148, %150, %cst_58 {dimension_numbers = #tpu.dot_dimension_numbers<[1], [0], [0], [1], [0, 0, 1, 1], [], []>} : vector<8x32xbf16>, vector<32x128xbf16>, vector<8x128xf32> -> vector<8x128xf32>
    %c0_59 = arith.constant 0 : index
    %c0_60 = arith.constant 0 : index
    %c0_61 = arith.constant 0 : index
    %152 = vector.load %arg13[%c0_59, %c0_60, %c0_61] : memref<1x1x128xf32, #tpu.memory_space<vmem>>, vector<1x1x128xf32>
    %153 = vector.shape_cast %152 : vector<1x1x128xf32> to vector<1x128xf32>
    %154 = vector.broadcast %153 : vector<1x128xf32> to vector<8x128xf32>
    %155 = arith.addf %151, %154 : vector<8x128xf32>
    %156 = vector.extract_strided_slice %155 {offsets = [0, 0], sizes = [8, 64], strides = [1, 1]} : vector<8x128xf32> to vector<8x64xf32>
    %157 = vector.extract_strided_slice %155 {offsets = [0, 64], sizes = [8, 64], strides = [1, 1]} : vector<8x128xf32> to vector<8x64xf32>
    %158 = arith.negf %157 : vector<8x64xf32>
    %159 = math.exp %158 : vector<8x64xf32>
    %cst_62 = arith.constant 1.000000e+00 : f32
    %160 = vector.broadcast %cst_62 : f32 to vector<8x64xf32>
    %161 = arith.addf %160, %159 : vector<8x64xf32>
    %162 = arith.divf %160, %161 : vector<8x64xf32>
    %163 = arith.mulf %156, %162 : vector<8x64xf32>
    %164 = arith.truncf %163 : vector<8x64xf32> to vector<8x64xbf16>
    %c0_63 = arith.constant 0 : index
    %c0_64 = arith.constant 0 : index
    %c0_65 = arith.constant 0 : index
    %165 = vector.load %arg14[%c0_63, %c0_64, %c0_65] : memref<1x64x32xbf16, #tpu.memory_space<vmem>>, vector<1x64x32xbf16>
    %166 = vector.shape_cast %165 : vector<1x64x32xbf16> to vector<64x32xbf16>
    %cst_66 = arith.constant dense<0.000000e+00> : vector<8x32xf32>
    %167 = tpu.matmul %164, %166, %cst_66 {dimension_numbers = #tpu.dot_dimension_numbers<[1], [0], [0], [1], [0, 0, 1, 1], [], []>} : vector<8x64xbf16>, vector<64x32xbf16>, vector<8x32xf32> -> vector<8x32xf32>
    %c0_67 = arith.constant 0 : index
    %c0_68 = arith.constant 0 : index
    %c0_69 = arith.constant 0 : index
    %168 = vector.load %arg15[%c0_67, %c0_68, %c0_69] : memref<1x1x32xf32, #tpu.memory_space<vmem>>, vector<1x1x32xf32>
    %169 = vector.shape_cast %168 : vector<1x1x32xf32> to vector<1x32xf32>
    %170 = vector.broadcast %169 : vector<1x32xf32> to vector<8x32xf32>
    %171 = arith.addf %167, %170 : vector<8x32xf32>
    %172 = arith.addf %133, %171 : vector<8x32xf32>
    %c0_70 = arith.constant 0 : index
    %c0_71 = arith.constant 0 : index
    %173 = vector.load %arg17[%c0_70, %c0_71] : memref<8x32xf32, #tpu.memory_space<vmem>>, vector<8x32xf32>
    tpu.vector_store %arg17[%c0_70, %c0_71], %172 {strides = array<i32>} : memref<8x32xf32, #tpu.memory_space<vmem>>, vector<8x32xf32>,
    %c1_i32 = arith.constant 1 : i32
    %174 = arith.cmpi eq, %arg1, %c1_i32 : i32
    %175 = arith.extui %174 : i1 to i32
    %c0_i32_72 = arith.constant 0 : i32
    %176 = arith.cmpi ne, %175, %c0_i32_72 : i32
    scf.if %176 {
      %c0_73 = arith.constant 0 : index
      %c0_74 = arith.constant 0 : index
      %177 = vector.load %arg5[%c0_73, %c0_74] : memref<1x32xf32, #tpu.memory_space<vmem>>, vector<1x32xf32>
      %178 = arith.mulf %172, %172 : vector<8x32xf32>
      %cst_75 = arith.constant dense<0.000000e+00> : vector<8xf32>
      %179 = vector.multi_reduction <add>, %178, %cst_75 [1] : vector<8x32xf32> to vector<8xf32>
      %180 = vector.shape_cast %179 : vector<8xf32> to vector<8x1xf32>
      %cst_76 = arith.constant 3.200000e+01 : f32
      %181 = vector.broadcast %cst_76 : f32 to vector<8x1xf32>
      %182 = arith.divf %180, %181 : vector<8x1xf32>
      %cst_77 = arith.constant 9.99999997E-7 : f32
      %183 = vector.broadcast %cst_77 : f32 to vector<8x1xf32>
      %184 = arith.addf %182, %183 : vector<8x1xf32>
      %185 = math.rsqrt %184 : vector<8x1xf32>
      %186 = vector.broadcast %185 : vector<8x1xf32> to vector<8x32xf32>
      %187 = arith.mulf %172, %186 : vector<8x32xf32>
      %188 = vector.broadcast %177 : vector<1x32xf32> to vector<8x32xf32>
      %189 = arith.mulf %187, %188 : vector<8x32xf32>
      %c0_78 = arith.constant 0 : index
      %c0_79 = arith.constant 0 : index
      %190 = vector.load %arg16[%c0_78, %c0_79] : memref<8x32xf32, #tpu.memory_space<vmem>>, vector<8x32xf32>
      tpu.vector_store %arg16[%c0_78, %c0_79], %189 {strides = array<i32>} : memref<8x32xf32, #tpu.memory_space<vmem>>, vector<8x32xf32>,
    } else {
    }
    return
  }
  func.func @transform_0(%arg0: i32, %arg1: i32) -> (i32, i32) {
    %c0_i32 = arith.constant 0 : i32
    %c0_i32_0 = arith.constant 0 : i32
    return %arg0, %c0_i32 : i32, i32
  }
  func.func @transform_1(%arg0: i32, %arg1: i32) -> (i32, i32) {
    %c0_i32 = arith.constant 0 : i32
    %c0_i32_0 = arith.constant 0 : i32
    %c0_i32_1 = arith.constant 0 : i32
    return %c0_i32, %c0_i32_0 : i32, i32
  }
  func.func @transform_2(%arg0: i32, %arg1: i32) -> (i32, i32) {
    %c0_i32 = arith.constant 0 : i32
    %c0_i32_0 = arith.constant 0 : i32
    %c0_i32_1 = arith.constant 0 : i32
    return %c0_i32, %c0_i32_0 : i32, i32
  }
  func.func @transform_3(%arg0: i32, %arg1: i32) -> (i32, i32) {
    %c0_i32 = arith.constant 0 : i32
    %c0_i32_0 = arith.constant 0 : i32
    %c0_i32_1 = arith.constant 0 : i32
    return %c0_i32, %c0_i32_0 : i32, i32
  }
  func.func @transform_4(%arg0: i32, %arg1: i32) -> (i32, i32, i32) {
    %c0_i32 = arith.constant 0 : i32
    %c0_i32_0 = arith.constant 0 : i32
    %c0_i32_1 = arith.constant 0 : i32
    return %arg1, %c0_i32, %c0_i32_0 : i32, i32, i32
  }
  func.func @transform_5(%arg0: i32, %arg1: i32) -> (i32, i32, i32) {
    %c0_i32 = arith.constant 0 : i32
    %c0_i32_0 = arith.constant 0 : i32
    %c0_i32_1 = arith.constant 0 : i32
    return %arg1, %c0_i32, %c0_i32_0 : i32, i32, i32
  }
  func.func @transform_6(%arg0: i32, %arg1: i32) -> (i32, i32, i32) {
    %c0_i32 = arith.constant 0 : i32
    %c0_i32_0 = arith.constant 0 : i32
    %c0_i32_1 = arith.constant 0 : i32
    return %arg1, %c0_i32, %c0_i32_0 : i32, i32, i32
  }
  func.func @transform_7(%arg0: i32, %arg1: i32) -> (i32, i32, i32) {
    %c0_i32 = arith.constant 0 : i32
    %c0_i32_0 = arith.constant 0 : i32
    %c0_i32_1 = arith.constant 0 : i32
    return %arg1, %c0_i32, %c0_i32_0 : i32, i32, i32
  }
  func.func @transform_8(%arg0: i32, %arg1: i32) -> (i32, i32, i32) {
    %c0_i32 = arith.constant 0 : i32
    %c0_i32_0 = arith.constant 0 : i32
    %c0_i32_1 = arith.constant 0 : i32
    return %arg1, %c0_i32, %c0_i32_0 : i32, i32, i32
  }
  func.func @transform_9(%arg0: i32, %arg1: i32) -> (i32, i32, i32) {
    %c0_i32 = arith.constant 0 : i32
    %c0_i32_0 = arith.constant 0 : i32
    %c0_i32_1 = arith.constant 0 : i32
    return %arg1, %c0_i32, %c0_i32_0 : i32, i32, i32
  }
  func.func @transform_10(%arg0: i32, %arg1: i32) -> (i32, i32, i32) {
    %c0_i32 = arith.constant 0 : i32
    %c0_i32_0 = arith.constant 0 : i32
    %c0_i32_1 = arith.constant 0 : i32
    return %arg1, %c0_i32, %c0_i32_0 : i32, i32, i32
  }
  func.func @transform_11(%arg0: i32, %arg1: i32) -> (i32, i32, i32) {
    %c0_i32 = arith.constant 0 : i32
    %c0_i32_0 = arith.constant 0 : i32
    %c0_i32_1 = arith.constant 0 : i32
    return %arg1, %c0_i32, %c0_i32_0 : i32, i32, i32
  }
  func.func @transform_12(%arg0: i32, %arg1: i32) -> (i32, i32, i32) {
    %c0_i32 = arith.constant 0 : i32
    %c0_i32_0 = arith.constant 0 : i32
    %c0_i32_1 = arith.constant 0 : i32
    return %arg1, %c0_i32, %c0_i32_0 : i32, i32, i32
  }
  func.func @transform_13(%arg0: i32, %arg1: i32) -> (i32, i32, i32) {
    %c0_i32 = arith.constant 0 : i32
    %c0_i32_0 = arith.constant 0 : i32
    %c0_i32_1 = arith.constant 0 : i32
    return %arg1, %c0_i32, %c0_i32_0 : i32, i32, i32
  }
  func.func @transform_14(%arg0: i32, %arg1: i32) -> (i32, i32) {
    %c0_i32 = arith.constant 0 : i32
    %c0_i32_0 = arith.constant 0 : i32
    return %arg0, %c0_i32 : i32, i32
  }
}

</mosaic_0001>

<llo_original>
// kernel: _lambda_.1
$region0: #{_lambda_.1}
  #allocation0 [shape = 'u32[]', space=smem, size = 0x4, offset = 0x4, fixed_abs, tag = 'smem constant byte address 0x4 - core index']
  #allocation1 [shape = 'u32[144,128]{1,0:T(1,128)}', space=vmem, size = 0x12000, scoped, tag = 'internal scratch']
  #allocation2 [shape = 'f32[8,32]{1,0:T(8,128)}', space=vmem, size = 0x1000, scoped, tag = 'scratch operand']
  %s0 = inlined_call_operand.vmem [shape: f32[16,32], index: 0, kind: input, shape index: {}]
  %s1 = inlined_call_operand.hbm [shape: f32[8,32], index: 1, kind: input, shape index: {}]
  %s2 = inlined_call_operand.vmem [shape: f32[8,32], index: 2, kind: input, shape index: {}]
  %s3 = inlined_call_operand.vmem [shape: f32[1,32], index: 3, kind: input, shape index: {}]
  %s4 = inlined_call_operand.vmem [shape: f32[2,1,32], index: 4, kind: input, shape index: {}, may-alias: {4,9}]
  %s5 = inlined_call_operand.vmem [shape: bf16[2,32,256], index: 5, kind: input, shape index: {}]
  %s6 = inlined_call_operand.vmem [shape: f32[2,1,256], index: 6, kind: input, shape index: {}]
  %s7 = inlined_call_operand.vmem [shape: bf16[2,32,32], index: 7, kind: input, shape index: {}]
  %s8 = inlined_call_operand.vmem [shape: f32[2,1,32], index: 8, kind: input, shape index: {}]
  %s9 = inlined_call_operand.vmem [shape: f32[2,1,32], index: 9, kind: input, shape index: {}, may-alias: {4,9}]
  %s10 = inlined_call_operand.vmem [shape: bf16[2,32,128], index: 10, kind: input, shape index: {}]
  %s11 = inlined_call_operand.vmem [shape: f32[2,1,128], index: 11, kind: input, shape index: {}]
  %s12 = inlined_call_operand.vmem [shape: bf16[2,64,32], index: 12, kind: input, shape index: {}]
  %s13 = inlined_call_operand.vmem [shape: f32[2,1,32], index: 13, kind: input, shape index: {}]
  %s14 = inlined_call_operand.hbm [shape: f32[16,32], index: 14, kind: output, shape index: {}]
  %s15 = sld [smem:[#allocation0]]
  $region101: #{_lambda_.1} parent=0
    _
  %s17 = ssub.s32 1, %s15
  %s18 = scalar_select 0, %s17, %s15
  $region1: #{_lambda_.1} parent=0
    #allocation3 [shape = 'u8[4096]{0}', space=vmem, size = 0x1000, scoped, tag = 'input window, operand 1, single buffered']
    #allocation4 [shape = 's32[2]{0}', space=sflag, size = 0x8, scoped, tag = 'scoped memory for _lambda_.1']
    #allocation5 [shape = 's32[2]{0}', space=sflag, size = 0x8, scoped, tag = 'scoped memory for _lambda_.1']
    #allocation6 [shape = 'u8[8192]{0}', space=vmem, size = 0x2000, scoped, tag = 'output window, operand 0']
    %19 = vsyncpa [#allocation4], 0
    %20 = vsyncpa [#allocation5], 0
    %s21 = scalar_lea.sflag [#allocation5], 1
    %22 = vsyncpa %s21, 0
    loop: start=0, step=1, limit=6
    $region2: #{_lambda_.1} parent=1 // loop_pre_header
      _
    $region3: #{_lambda_.1} parent=1 // loop_header
      %s24 = sphi 0, %s28
      %p25 = scmp.ge.s32.totalorder %s24, 6
      %s31 = sphi 0, %s43
      %s32 = sphi 0, %s39
      %s33 = sphi 0, %s31
      %s34 = sphi 0, %s32
      %s35 = sphi 0, %s33
      %s36 = sphi 0, %s34
      %s46 = sphi 0, %s48
      %s49 = sphi 0, %s46
      %s50 = sphi 0, %s49
      %s66 = sphi 0, %s50
      %s70 = sphi 0, %s70
      %s72 = sphi 0, %s70
      %s73 = sphi 0, %s72
      %s87 = sphi 0, %s73
      %s91 = sphi 0, %s91
      %s93 = sphi 0, %s91
      %s94 = sphi 0, %s93
      %s108 = sphi 0, %s94
      %s112 = sphi 0, %s112
      %s114 = sphi 0, %s112
      %s115 = sphi 0, %s114
      %s129 = sphi 0, %s115
      %s135 = sphi 0, %s137
      %s138 = sphi 0, %s135
      %s139 = sphi 0, %s138
      %s155 = sphi 0, %s139
      %s161 = sphi 0, %s163
      %s164 = sphi 0, %s161
      %s165 = sphi 0, %s164
      %s181 = sphi 0, %s165
      %s187 = sphi 0, %s189
      %s190 = sphi 0, %s187
      %s191 = sphi 0, %s190
      %s207 = sphi 0, %s191
      %s213 = sphi 0, %s215
      %s216 = sphi 0, %s213
      %s217 = sphi 0, %s216
      %s233 = sphi 0, %s217
      %s239 = sphi 0, %s241
      %s242 = sphi 0, %s239
      %s243 = sphi 0, %s242
      %s259 = sphi 0, %s243
      %s265 = sphi 0, %s267
      %s268 = sphi 0, %s265
      %s269 = sphi 0, %s268
      %s285 = sphi 0, %s269
      %s291 = sphi 0, %s293
      %s294 = sphi 0, %s291
      %s295 = sphi 0, %s294
      %s311 = sphi 0, %s295
      %s317 = sphi 0, %s319
      %s320 = sphi 0, %s317
      %s321 = sphi 0, %s320
      %s337 = sphi 0, %s321
      %s343 = sphi 0, %s345
      %s346 = sphi 0, %s343
      %s347 = sphi 0, %s346
      %s363 = sphi 0, %s347
      %s369 = sphi 0, %s371
      %s372 = sphi 0, %s369
      %s373 = sphi 0, %s372
      %s389 = sphi 0, %s373
      %s395 = sphi 0, %s397
      %s398 = sphi 0, %s395
      %s399 = sphi 0, %s398
      %s415 = sphi 0, %s399
    $region4: #{_lambda_.1} parent=1 // loop_header_branch
      %27 = sbr.rel (%p25) target = $region8
    $region5: #{_lambda_.1} parent=1 // loop_body
      %s29 = ssub.s32 %s24, 1
      %s30 = ssub.s32 %s24, 2
      %s37 = sadd.s32 1, %s32
      %p38 = scmp.ge.s32.totalorder %s37, 2
      %s39 = scalar_select %p38, 0, %s37
      %s40 = sadd.s32 1, %s31
      %s41 = scalar_select %p38, %s40, %s31
      %p42 = scmp.ge.s32.totalorder %s41, 2
      %s43 = scalar_select %p42, 0, %s41
      %s44 = ssub.s32 %s31, %s43
      %p45 = scmp.eq.s32.totalorder %s44, 0
      %s47 = sadd.s32 %s46, 1
      %s48 = scalar_select %p45, %s46, %s47
      %p51 = pneg %p45
      %p52 = scmp.eq.s32.totalorder %s24, 3
      %p53 = por %p51, %p52
      %p54 = scmp.ne.s32.totalorder %s46, %s49
      %p55 = scmp.eq.s32.totalorder %s24, 0
      %p56 = por %p54, %p55
      %p57 = scmp.ne.s32.totalorder %s46, %s49
      %p58 = scmp.eq.s32.totalorder %s29, 3
      %p59 = por %p57, %p58
      %p60 = scmp.ne.s32.totalorder %s49, %s50
      %p61 = scmp.eq.s32.totalorder %s29, 0
      %p62 = por %p60, %p61
      %p63 = scmp.ne.s32.totalorder %s49, %s50
      %p64 = scmp.eq.s32.totalorder %s30, 3
      %p65 = por %p63, %p64
      %p67 = scmp.ne.s32.totalorder %s50, %s66
      %p68 = scmp.eq.s32.totalorder %s30, 0
      %p69 = por %p67, %p68
      %s71 = sadd.s32 %s70, 1
      %p74 = scmp.eq.s32.totalorder %s24, 3
      %p75 = scmp.ne.s32.totalorder %s70, %s72
      %p76 = scmp.eq.s32.totalorder %s24, 0
      %p77 = por %p75, %p76
      %p78 = scmp.ne.s32.totalorder %s70, %s72
      %p79 = scmp.eq.s32.totalorder %s29, 3
      %p80 = por %p78, %p79
      %p81 = scmp.ne.s32.totalorder %s72, %s73
      %p82 = scmp.eq.s32.totalorder %s29, 0
      %p83 = por %p81, %p82
      %p84 = scmp.ne.s32.totalorder %s72, %s73
      %p85 = scmp.eq.s32.totalorder %s30, 3
      %p86 = por %p84, %p85
      %p88 = scmp.ne.s32.totalorder %s73, %s87
      %p89 = scmp.eq.s32.totalorder %s30, 0
      %p90 = por %p88, %p89
      %s92 = sadd.s32 %s91, 1
      %p95 = scmp.eq.s32.totalorder %s24, 3
      %p96 = scmp.ne.s32.totalorder %s91, %s93
      %p97 = scmp.eq.s32.totalorder %s24, 0
      %p98 = por %p96, %p97
      %p99 = scmp.ne.s32.totalorder %s91, %s93
      %p100 = scmp.eq.s32.totalorder %s29, 3
      %p101 = por %p99, %p100
      %p102 = scmp.ne.s32.totalorder %s93, %s94
      %p103 = scmp.eq.s32.totalorder %s29, 0
      %p104 = por %p102, %p103
      %p105 = scmp.ne.s32.totalorder %s93, %s94
      %p106 = scmp.eq.s32.totalorder %s30, 3
      %p107 = por %p105, %p106
      %p109 = scmp.ne.s32.totalorder %s94, %s108
      %p110 = scmp.eq.s32.totalorder %s30, 0
      %p111 = por %p109, %p110
      %s113 = sadd.s32 %s112, 1
      %p116 = scmp.eq.s32.totalorder %s24, 3
      %p117 = scmp.ne.s32.totalorder %s112, %s114
      %p118 = scmp.eq.s32.totalorder %s24, 0
      %p119 = por %p117, %p118
      %p120 = scmp.ne.s32.totalorder %s112, %s114
      %p121 = scmp.eq.s32.totalorder %s29, 3
      %p122 = por %p120, %p121
      %p123 = scmp.ne.s32.totalorder %s114, %s115
      %p124 = scmp.eq.s32.totalorder %s29, 0
      %p125 = por %p123, %p124
      %p126 = scmp.ne.s32.totalorder %s114, %s115
      %p127 = scmp.eq.s32.totalorder %s30, 3
      %p128 = por %p126, %p127
      %p130 = scmp.ne.s32.totalorder %s115, %s129
      %p131 = scmp.eq.s32.totalorder %s30, 0
      %p132 = por %p130, %p131
      %s133 = ssub.s32 %s32, %s39
      %p134 = scmp.eq.s32.totalorder %s133, 0
      %s136 = sadd.s32 %s135, 1
      %s137 = scalar_select %p134, %s135, %s136
      %p140 = pneg %p134
      %p141 = scmp.eq.s32.totalorder %s24, 3
      %p142 = por %p140, %p141
      %p143 = scmp.ne.s32.totalorder %s135, %s138
      %p144 = scmp.eq.s32.totalorder %s24, 0
      %p145 = por %p143, %p144
      %p146 = scmp.ne.s32.totalorder %s135, %s138
      %p147 = scmp.eq.s32.totalorder %s29, 3
      %p148 = por %p146, %p147
      %p149 = scmp.ne.s32.totalorder %s138, %s139
      %p150 = scmp.eq.s32.totalorder %s29, 0
      %p151 = por %p149, %p150
      %p152 = scmp.ne.s32.totalorder %s138, %s139
      %p153 = scmp.eq.s32.totalorder %s30, 3
      %p154 = por %p152, %p153
      %p156 = scmp.ne.s32.totalorder %s139, %s155
      %p157 = scmp.eq.s32.totalorder %s30, 0
      %p158 = por %p156, %p157
      %s159 = ssub.s32 %s32, %s39
      %p160 = scmp.eq.s32.totalorder %s159, 0
      %s162 = sadd.s32 %s161, 1
      %s163 = scalar_select %p160, %s161, %s162
      %p166 = pneg %p160
      %p167 = scmp.eq.s32.totalorder %s24, 3
      %p168 = por %p166, %p167
      %p169 = scmp.ne.s32.totalorder %s161, %s164
      %p170 = scmp.eq.s32.totalorder %s24, 0
      %p171 = por %p169, %p170
      %p172 = scmp.ne.s32.totalorder %s161, %s164
      %p173 = scmp.eq.s32.totalorder %s29, 3
      %p174 = por %p172, %p173
      %p175 = scmp.ne.s32.totalorder %s164, %s165
      %p176 = scmp.eq.s32.totalorder %s29, 0
      %p177 = por %p175, %p176
      %p178 = scmp.ne.s32.totalorder %s164, %s165
      %p179 = scmp.eq.s32.totalorder %s30, 3
      %p180 = por %p178, %p179
      %p182 = scmp.ne.s32.totalorder %s165, %s181
      %p183 = scmp.eq.s32.totalorder %s30, 0
      %p184 = por %p182, %p183
      %s185 = ssub.s32 %s32, %s39
      %p186 = scmp.eq.s32.totalorder %s185, 0
      %s188 = sadd.s32 %s187, 1
      %s189 = scalar_select %p186, %s187, %s188
      %p192 = pneg %p186
      %p193 = scmp.eq.s32.totalorder %s24, 3
      %p194 = por %p192, %p193
      %p195 = scmp.ne.s32.totalorder %s187, %s190
      %p196 = scmp.eq.s32.totalorder %s24, 0
      %p197 = por %p195, %p196
      %p198 = scmp.ne.s32.totalorder %s187, %s190
      %p199 = scmp.eq.s32.totalorder %s29, 3
      %p200 = por %p198, %p199
      %p201 = scmp.ne.s32.totalorder %s190, %s191
      %p202 = scmp.eq.s32.totalorder %s29, 0
      %p203 = por %p201, %p202
      %p204 = scmp.ne.s32.totalorder %s190, %s191
      %p205 = scmp.eq.s32.totalorder %s30, 3
      %p206 = por %p204, %p205
      %p208 = scmp.ne.s32.totalorder %s191, %s207
      %p209 = scmp.eq.s32.totalorder %s30, 0
      %p210 = por %p208, %p209
      %s211 = ssub.s32 %s32, %s39
      %p212 = scmp.eq.s32.totalorder %s211, 0
      %s214 = sadd.s32 %s213, 1
      %s215 = scalar_select %p212, %s213, %s214
      %p218 = pneg %p212
      %p219 = scmp.eq.s32.totalorder %s24, 3
      %p220 = por %p218, %p219
      %p221 = scmp.ne.s32.totalorder %s213, %s216
      %p222 = scmp.eq.s32.totalorder %s24, 0
      %p223 = por %p221, %p222
      %p224 = scmp.ne.s32.totalorder %s213, %s216
      %p225 = scmp.eq.s32.totalorder %s29, 3
      %p226 = por %p224, %p225
      %p227 = scmp.ne.s32.totalorder %s216, %s217
      %p228 = scmp.eq.s32.totalorder %s29, 0
      %p229 = por %p227, %p228
      %p230 = scmp.ne.s32.totalorder %s216, %s217
      %p231 = scmp.eq.s32.totalorder %s30, 3
      %p232 = por %p230, %p231
      %p234 = scmp.ne.s32.totalorder %s217, %s233
      %p235 = scmp.eq.s32.totalorder %s30, 0
      %p236 = por %p234, %p235
      %s237 = ssub.s32 %s32, %s39
      %p238 = scmp.eq.s32.totalorder %s237, 0
      %s240 = sadd.s32 %s239, 1
      %s241 = scalar_select %p238, %s239, %s240
      %p244 = pneg %p238
      %p245 = scmp.eq.s32.totalorder %s24, 3
      %p246 = por %p244, %p245
      %p247 = scmp.ne.s32.totalorder %s239, %s242
      %p248 = scmp.eq.s32.totalorder %s24, 0
      %p249 = por %p247, %p248
      %p250 = scmp.ne.s32.totalorder %s239, %s242
      %p251 = scmp.eq.s32.totalorder %s29, 3
      %p252 = por %p250, %p251
      %p253 = scmp.ne.s32.totalorder %s242, %s243
      %p254 = scmp.eq.s32.totalorder %s29, 0
      %p255 = por %p253, %p254
      %p256 = scmp.ne.s32.totalorder %s242, %s243
      %p257 = scmp.eq.s32.totalorder %s30, 3
      %p258 = por %p256, %p257
      %p260 = scmp.ne.s32.totalorder %s243, %s259
      %p261 = scmp.eq.s32.totalorder %s30, 0
      %p262 = por %p260, %p261
      %s263 = ssub.s32 %s32, %s39
      %p264 = scmp.eq.s32.totalorder %s263, 0
      %s266 = sadd.s32 %s265, 1
      %s267 = scalar_select %p264, %s265, %s266
      %p270 = pneg %p264
      %p271 = scmp.eq.s32.totalorder %s24, 3
      %p272 = por %p270, %p271
      %p273 = scmp.ne.s32.totalorder %s265, %s268
      %p274 = scmp.eq.s32.totalorder %s24, 0
      %p275 = por %p273, %p274
      %p276 = scmp.ne.s32.totalorder %s265, %s268
      %p277 = scmp.eq.s32.totalorder %s29, 3
      %p278 = por %p276, %p277
      %p279 = scmp.ne.s32.totalorder %s268, %s269
      %p280 = scmp.eq.s32.totalorder %s29, 0
      %p281 = por %p279, %p280
      %p282 = scmp.ne.s32.totalorder %s268, %s269
      %p283 = scmp.eq.s32.totalorder %s30, 3
      %p284 = por %p282, %p283
      %p286 = scmp.ne.s32.totalorder %s269, %s285
      %p287 = scmp.eq.s32.totalorder %s30, 0
      %p288 = por %p286, %p287
      %s289 = ssub.s32 %s32, %s39
      %p290 = scmp.eq.s32.totalorder %s289, 0
      %s292 = sadd.s32 %s291, 1
      %s293 = scalar_select %p290, %s291, %s292
      %p296 = pneg %p290
      %p297 = scmp.eq.s32.totalorder %s24, 3
      %p298 = por %p296, %p297
      %p299 = scmp.ne.s32.totalorder %s291, %s294
      %p300 = scmp.eq.s32.totalorder %s24, 0
      %p301 = por %p299, %p300
      %p302 = scmp.ne.s32.totalorder %s291, %s294
      %p303 = scmp.eq.s32.totalorder %s29, 3
      %p304 = por %p302, %p303
      %p305 = scmp.ne.s32.totalorder %s294, %s295
      %p306 = scmp.eq.s32.totalorder %s29, 0
      %p307 = por %p305, %p306
      %p308 = scmp.ne.s32.totalorder %s294, %s295
      %p309 = scmp.eq.s32.totalorder %s30, 3
      %p310 = por %p308, %p309
      %p312 = scmp.ne.s32.totalorder %s295, %s311
      %p313 = scmp.eq.s32.totalorder %s30, 0
      %p314 = por %p312, %p313
      %s315 = ssub.s32 %s32, %s39
      %p316 = scmp.eq.s32.totalorder %s315, 0
      %s318 = sadd.s32 %s317, 1
      %s319 = scalar_select %p316, %s317, %s318
      %p322 = pneg %p316
      %p323 = scmp.eq.s32.totalorder %s24, 3
      %p324 = por %p322, %p323
      %p325 = scmp.ne.s32.totalorder %s317, %s320
      %p326 = scmp.eq.s32.totalorder %s24, 0
      %p327 = por %p325, %p326
      %p328 = scmp.ne.s32.totalorder %s317, %s320
      %p329 = scmp.eq.s32.totalorder %s29, 3
      %p330 = por %p328, %p329
      %p331 = scmp.ne.s32.totalorder %s320, %s321
      %p332 = scmp.eq.s32.totalorder %s29, 0
      %p333 = por %p331, %p332
      %p334 = scmp.ne.s32.totalorder %s320, %s321
      %p335 = scmp.eq.s32.totalorder %s30, 3
      %p336 = por %p334, %p335
      %p338 = scmp.ne.s32.totalorder %s321, %s337
      %p339 = scmp.eq.s32.totalorder %s30, 0
      %p340 = por %p338, %p339
      %s341 = ssub.s32 %s32, %s39
      %p342 = scmp.eq.s32.totalorder %s341, 0
      %s344 = sadd.s32 %s343, 1
      %s345 = scalar_select %p342, %s343, %s344
      %p348 = pneg %p342
      %p349 = scmp.eq.s32.totalorder %s24, 3
      %p350 = por %p348, %p349
      %p351 = scmp.ne.s32.totalorder %s343, %s346
      %p352 = scmp.eq.s32.totalorder %s24, 0
      %p353 = por %p351, %p352
      %p354 = scmp.ne.s32.totalorder %s343, %s346
      %p355 = scmp.eq.s32.totalorder %s29, 3
      %p356 = por %p354, %p355
      %p357 = scmp.ne.s32.totalorder %s346, %s347
      %p358 = scmp.eq.s32.totalorder %s29, 0
      %p359 = por %p357, %p358
      %p360 = scmp.ne.s32.totalorder %s346, %s347
      %p361 = scmp.eq.s32.totalorder %s30, 3
      %p362 = por %p360, %p361
      %p364 = scmp.ne.s32.totalorder %s347, %s363
      %p365 = scmp.eq.s32.totalorder %s30, 0
      %p366 = por %p364, %p365
      %s367 = ssub.s32 %s32, %s39
      %p368 = scmp.eq.s32.totalorder %s367, 0
      %s370 = sadd.s32 %s369, 1
      %s371 = scalar_select %p368, %s369, %s370
      %p374 = pneg %p368
      %p375 = scmp.eq.s32.totalorder %s24, 3
      %p376 = por %p374, %p375
      %p377 = scmp.ne.s32.totalorder %s369, %s372
      %p378 = scmp.eq.s32.totalorder %s24, 0
      %p379 = por %p377, %p378
      %p380 = scmp.ne.s32.totalorder %s369, %s372
      %p381 = scmp.eq.s32.totalorder %s29, 3
      %p382 = por %p380, %p381
      %p383 = scmp.ne.s32.totalorder %s372, %s373
      %p384 = scmp.eq.s32.totalorder %s29, 0
      %p385 = por %p383, %p384
      %p386 = scmp.ne.s32.totalorder %s372, %s373
      %p387 = scmp.eq.s32.totalorder %s30, 3
      %p388 = por %p386, %p387
      %p390 = scmp.ne.s32.totalorder %s373, %s389
      %p391 = scmp.eq.s32.totalorder %s30, 0
      %p392 = por %p390, %p391
      %s393 = ssub.s32 %s31, %s43
      %p394 = scmp.eq.s32.totalorder %s393, 0
      %s396 = sadd.s32 %s395, 1
      %s397 = scalar_select %p394, %s395, %s396
      %p400 = pneg %p394
      %p401 = scmp.eq.s32.totalorder %s24, 3
      %p402 = por %p400, %p401
      %p403 = scmp.ne.s32.totalorder %s395, %s398
      %p404 = scmp.eq.s32.totalorder %s24, 0
      %p405 = por %p403, %p404
      %p406 = scmp.ne.s32.totalorder %s395, %s398
      %p407 = scmp.eq.s32.totalorder %s29, 3
      %p408 = por %p406, %p407
      %p409 = scmp.ne.s32.totalorder %s398, %s399
      %p410 = scmp.eq.s32.totalorder %s29, 0
      %p411 = por %p409, %p410
      %p412 = scmp.ne.s32.totalorder %s398, %s399
      %p413 = scmp.eq.s32.totalorder %s30, 3
      %p414 = por %p412, %p413
      %p416 = scmp.ne.s32.totalorder %s399, %s415
      %p417 = scmp.eq.s32.totalorder %s30, 0
      %p418 = por %p416, %p417
      %p419 = scmp.le.s32.totalorder 1, %s24
      %p420 = scmp.lt.s32.totalorder %s24, 5
      %p421 = pnand %p419, %p420
      %p422 = pneg %p421
      // Predicated region
      $region9: #{_lambda_.1} parent=5 // pred_check
        _
      $region10: #{_lambda_.1} parent=5 // pred_check_branch
        %424 = sbr.rel (%p421) target = $region12
      $region11: #{_lambda_.1} parent=5 // pred_region
        %s425 = ssub.s32 %s24, 1
        // Predicated region
        $region13: #{_lambda_.1} parent=11 // pred_check
          %p426 = pneg %p83
        $region14: #{_lambda_.1} parent=11 // pred_check_branch
          %428 = sbr.rel (%p426) target = $region16
        $region15: #{_lambda_.1} parent=11 // pred_region
          %s430 = ssub.s32 128, 128
          %431 = vsyncadd [#allocation4], %s430
          %s433 = sshll.u32 [#allocation3], 4
          %s434 = int_to_ptr.vmem [resolvable:$true] %s433
          %436 = dma.hbm_to_vmem [thread:$0]  %s1, 128, %s434, [#allocation4]
        $region16: #{_lambda_.1} parent=11 // pred_fallthru
          _
        // Predicated region
        $region17: #{_lambda_.1} parent=11 // pred_check
          %p437 = pneg %p104
        $region18: #{_lambda_.1} parent=11 // pred_check_branch
          %439 = sbr.rel (%p437) target = $region20
        $region19: #{_lambda_.1} parent=11 // pred_region
          _
        $region20: #{_lambda_.1} parent=11 // pred_fallthru
          _
        // Predicated region
        $region21: #{_lambda_.1} parent=11 // pred_check
          %p440 = pneg %p125
        $region22: #{_lambda_.1} parent=11 // pred_check_branch
          %442 = sbr.rel (%p440) target = $region24
        $region23: #{_lambda_.1} parent=11 // pred_region
          _
        $region24: #{_lambda_.1} parent=11 // pred_fallthru
          _
      $region12: #{_lambda_.1} parent=5 // pred_fallthru
        _
      %p443 = scmp.lt.s32.totalorder %s24, 4
      // Predicated region
      $region25: #{_lambda_.1} parent=5 // pred_check
        %p444 = pneg %p443
      $region26: #{_lambda_.1} parent=5 // pred_check_branch
        %446 = sbr.rel (%p444) target = $region28
      $region27: #{_lambda_.1} parent=5 // pred_region
        // Predicated region
        $region29: #{_lambda_.1} parent=27 // pred_check
          %p447 = pneg %p56
        $region30: #{_lambda_.1} parent=27 // pred_check_branch
          %449 = sbr.rel (%p447) target = $region32
        $region31: #{_lambda_.1} parent=27 // pred_region
          %p450 = scmp.lt.s32.totalorder %s31, 1
          %s451 = scalar_select %p450, %s31, 1
          %s452 = smul.addr %s451, 8
          %s453 = scalar_lea.vmem %s0, %s452
        $region32: #{_lambda_.1} parent=27 // pred_fallthru
          _
        // Predicated region
        $region33: #{_lambda_.1} parent=27 // pred_check
          %p454 = pneg %p145
        $region34: #{_lambda_.1} parent=27 // pred_check_branch
          %456 = sbr.rel (%p454) target = $region36
        $region35: #{_lambda_.1} parent=27 // pred_region
          %p457 = scmp.lt.s32.totalorder %s32, 1
          %s458 = scalar_select %p457, %s32, 1
          %s459 = scalar_lea.vmem %s4, %s458
        $region36: #{_lambda_.1} parent=27 // pred_fallthru
          _
        // Predicated region
        $region37: #{_lambda_.1} parent=27 // pred_check
          %p460 = pneg %p171
        $region38: #{_lambda_.1} parent=27 // pred_check_branch
          %462 = sbr.rel (%p460) target = $region40
        $region39: #{_lambda_.1} parent=27 // pred_region
          %p463 = scmp.lt.s32.totalorder %s32, 1
          %s464 = scalar_select %p463, %s32, 1
          %s465 = smul.addr %s464, 8
          %s466 = smul.addr %s465, 4
          %s467 = scalar_lea.vmem %s5, %s466
        $region40: #{_lambda_.1} parent=27 // pred_fallthru
          _
        // Predicated region
        $region41: #{_lambda_.1} parent=27 // pred_check
          %p468 = pneg %p197
        $region42: #{_lambda_.1} parent=27 // pred_check_branch
          %470 = sbr.rel (%p468) target = $region44
        $region43: #{_lambda_.1} parent=27 // pred_region
          %p471 = scmp.lt.s32.totalorder %s32, 1
          %s472 = scalar_select %p471, %s32, 1
          %s473 = smul.addr %s472, 2
          %s474 = scalar_lea.vmem %s6, %s473
        $region44: #{_lambda_.1} parent=27 // pred_fallthru
          _
        // Predicated region
        $region45: #{_lambda_.1} parent=27 // pred_check
          %p475 = pneg %p223
        $region46: #{_lambda_.1} parent=27 // pred_check_branch
          %477 = sbr.rel (%p475) target = $region48
        $region47: #{_lambda_.1} parent=27 // pred_region
          %p478 = scmp.lt.s32.totalorder %s32, 1
          %s479 = scalar_select %p478, %s32, 1
          %s480 = smul.addr %s479, 4
          %s481 = smul.addr %s480, 4
          %s482 = scalar_lea.vmem %s7, %s481
        $region48: #{_lambda_.1} parent=27 // pred_fallthru
          _
        // Predicated region
        $region49: #{_lambda_.1} parent=27 // pred_check
          %p483 = pneg %p249
        $region50: #{_lambda_.1} parent=27 // pred_check_branch
          %485 = sbr.rel (%p483) target = $region52
        $region51: #{_lambda_.1} parent=27 // pred_region
          %p486 = scmp.lt.s32.totalorder %s32, 1
          %s487 = scalar_select %p486, %s32, 1
          %s488 = scalar_lea.vmem %s8, %s487
        $region52: #{_lambda_.1} parent=27 // pred_fallthru
          _
        // Predicated region
        $region53: #{_lambda_.1} parent=27 // pred_check
          %p489 = pneg %p275
        $region54: #{_lambda_.1} parent=27 // pred_check_branch
          %491 = sbr.rel (%p489) target = $region56
        $region55: #{_lambda_.1} parent=27 // pred_region
          %p492 = scmp.lt.s32.totalorder %s32, 1
          %s493 = scalar_select %p492, %s32, 1
          %s494 = scalar_lea.vmem %s9, %s493
        $region56: #{_lambda_.1} parent=27 // pred_fallthru
          _
        // Predicated region
        $region57: #{_lambda_.1} parent=27 // pred_check
          %p495 = pneg %p301
        $region58: #{_lambda_.1} parent=27 // pred_check_branch
          %497 = sbr.rel (%p495) target = $region60
        $region59: #{_lambda_.1} parent=27 // pred_region
          %p498 = scmp.lt.s32.totalorder %s32, 1
          %s499 = scalar_select %p498, %s32, 1
          %s500 = smul.addr %s499, 4
          %s501 = smul.addr %s500, 4
          %s502 = scalar_lea.vmem %s10, %s501
        $region60: #{_lambda_.1} parent=27 // pred_fallthru
          _
        // Predicated region
        $region61: #{_lambda_.1} parent=27 // pred_check
          %p503 = pneg %p327
        $region62: #{_lambda_.1} parent=27 // pred_check_branch
          %505 = sbr.rel (%p503) target = $region64
        $region63: #{_lambda_.1} parent=27 // pred_region
          %p506 = scmp.lt.s32.totalorder %s32, 1
          %s507 = scalar_select %p506, %s32, 1
          %s508 = scalar_lea.vmem %s11, %s507
        $region64: #{_lambda_.1} parent=27 // pred_fallthru
          _
        // Predicated region
        $region65: #{_lambda_.1} parent=27 // pred_check
          %p509 = pneg %p353
        $region66: #{_lambda_.1} parent=27 // pred_check_branch
          %511 = sbr.rel (%p509) target = $region68
        $region67: #{_lambda_.1} parent=27 // pred_region
          %p512 = scmp.lt.s32.totalorder %s32, 1
          %s513 = scalar_select %p512, %s32, 1
          %s514 = smul.addr %s513, 8
          %s515 = smul.addr %s514, 4
          %s516 = scalar_lea.vmem %s12, %s515
        $region68: #{_lambda_.1} parent=27 // pred_fallthru
          _
        // Predicated region
        $region69: #{_lambda_.1} parent=27 // pred_check
          %p517 = pneg %p379
        $region70: #{_lambda_.1} parent=27 // pred_check_branch
          %519 = sbr.rel (%p517) target = $region72
        $region71: #{_lambda_.1} parent=27 // pred_region
          %p520 = scmp.lt.s32.totalorder %s32, 1
          %s521 = scalar_select %p520, %s32, 1
          %s522 = scalar_lea.vmem %s13, %s521
        $region72: #{_lambda_.1} parent=27 // pred_fallthru
          _
      $region28: #{_lambda_.1} parent=5 // pred_fallthru
        _
      %p523 = scmp.le.s32.totalorder 1, %s24
      %p524 = scmp.lt.s32.totalorder %s24, 5
      %p525 = pnand %p523, %p524
      %p526 = pneg %p525
      // Predicated region
      $region73: #{_lambda_.1} parent=5 // pred_check
        _
      $region74: #{_lambda_.1} parent=5 // pred_check_branch
        %528 = sbr.rel (%p525) target = $region76
      $region75: #{_lambda_.1} parent=5 // pred_region
        %s529 = ssub.s32 %s24, 1
        // Predicated region
        $region77: #{_lambda_.1} parent=75 // pred_check
          %p530 = pneg %p83
        $region78: #{_lambda_.1} parent=75 // pred_check_branch
          %532 = sbr.rel (%p530) target = $region80
        $region79: #{_lambda_.1} parent=75 // pred_region
          %533 = dma.done [#allocation4], 128
        $region80: #{_lambda_.1} parent=75 // pred_fallthru
          _
        %p534 = scmp.lt.s32.totalorder %s33, 1
        %s535 = scalar_select %p534, %s33, 1
        %s536 = smul.addr %s535, 8
        %s537 = scalar_lea.vmem %s0, %s536
        %p538 = pneg %p62
        %p539 = pneg %p59
        %p540 = pneg %p83
        %p541 = pneg %p80
        %p542 = pneg %p104
        %p543 = pneg %p101
        %p544 = pneg %p125
        %p545 = pneg %p122
        %p546 = scmp.lt.s32.totalorder %s34, 1
        %s547 = scalar_select %p546, %s34, 1
        %s548 = scalar_lea.vmem %s4, %s547
        %p549 = pneg %p151
        %p550 = pneg %p148
        %p551 = scmp.lt.s32.totalorder %s34, 1
        %s552 = scalar_select %p551, %s34, 1
        %s553 = smul.addr %s552, 8
        %s554 = smul.addr %s553, 4
        %s555 = scalar_lea.vmem %s5, %s554
        %p556 = pneg %p177
        %p557 = pneg %p174
        %p558 = scmp.lt.s32.totalorder %s34, 1
        %s559 = scalar_select %p558, %s34, 1
        %s560 = smul.addr %s559, 2
        %s561 = scalar_lea.vmem %s6, %s560
        %p562 = pneg %p203
        %p563 = pneg %p200
        %p564 = scmp.lt.s32.totalorder %s34, 1
        %s565 = scalar_select %p564, %s34, 1
        %s566 = smul.addr %s565, 4
        %s567 = smul.addr %s566, 4
        %s568 = scalar_lea.vmem %s7, %s567
        %p569 = pneg %p229
        %p570 = pneg %p226
        %p571 = scmp.lt.s32.totalorder %s34, 1
        %s572 = scalar_select %p571, %s34, 1
        %s573 = scalar_lea.vmem %s8, %s572
        %p574 = pneg %p255
        %p575 = pneg %p252
        %p576 = scmp.lt.s32.totalorder %s34, 1
        %s577 = scalar_select %p576, %s34, 1
        %s578 = scalar_lea.vmem %s9, %s577
        %p579 = pneg %p281
        %p580 = pneg %p278
        %p581 = scmp.lt.s32.totalorder %s34, 1
        %s582 = scalar_select %p581, %s34, 1
        %s583 = smul.addr %s582, 4
        %s584 = smul.addr %s583, 4
        %s585 = scalar_lea.vmem %s10, %s584
        %p586 = pneg %p307
        %p587 = pneg %p304
        %p588 = scmp.lt.s32.totalorder %s34, 1
        %s589 = scalar_select %p588, %s34, 1
        %s590 = scalar_lea.vmem %s11, %s589
        %p591 = pneg %p333
        %p592 = pneg %p330
        %p593 = scmp.lt.s32.totalorder %s34, 1
        %s594 = scalar_select %p593, %s34, 1
        %s595 = smul.addr %s594, 8
        %s596 = smul.addr %s595, 4
        %s597 = scalar_lea.vmem %s12, %s596
        %p598 = pneg %p359
        %p599 = pneg %p356
        %p600 = scmp.lt.s32.totalorder %s34, 1
        %s601 = scalar_select %p600, %s34, 1
        %s602 = scalar_lea.vmem %s13, %s601
        %p603 = pneg %p385
        %p604 = pneg %p382
        %p605 = pneg %p411
        %p606 = pneg %p408
        %s607 = sand.u32 %s398, 1
        %s608 = scalar_lea.sflag [#allocation5], %s607
        %s609 = sand.u32 %s398, 1
        %s610 = smul.addr %s609, 8
        %s611 = scalar_lea.vmem [#allocation6], %s610
        %p612 = scmp.lt.s32.totalorder %s33, 1
        %s613 = scalar_select %p612, %s33, 1
        %s614 = smul.addr %s613, 8
        %s615 = scalar_lea.vmem %s0, %s614
        %p616 = scmp.lt.s32.totalorder %s34, 1
        %s617 = scalar_select %p616, %s34, 1
        %s618 = scalar_lea.vmem %s4, %s617
        %p619 = scmp.lt.s32.totalorder %s34, 1
        %s620 = scalar_select %p619, %s34, 1
        %s621 = smul.addr %s620, 8
        %s622 = smul.addr %s621, 4
        %s623 = scalar_lea.vmem %s5, %s622
        %p624 = scmp.lt.s32.totalorder %s34, 1
        %s625 = scalar_select %p624, %s34, 1
        %s626 = smul.addr %s625, 2
        %s627 = scalar_lea.vmem %s6, %s626
        %p628 = scmp.lt.s32.totalorder %s34, 1
        %s629 = scalar_select %p628, %s34, 1
        %s630 = smul.addr %s629, 4
        %s631 = smul.addr %s630, 4
        %s632 = scalar_lea.vmem %s7, %s631
        %p633 = scmp.lt.s32.totalorder %s34, 1
        %s634 = scalar_select %p633, %s34, 1
        %s635 = scalar_lea.vmem %s8, %s634
        %p636 = scmp.lt.s32.totalorder %s34, 1
        %s637 = scalar_select %p636, %s34, 1
        %s638 = scalar_lea.vmem %s9, %s637
        %p639 = scmp.lt.s32.totalorder %s34, 1
        %s640 = scalar_select %p639, %s34, 1
        %s641 = smul.addr %s640, 4
        %s642 = smul.addr %s641, 4
        %s643 = scalar_lea.vmem %s10, %s642
        %p644 = scmp.lt.s32.totalorder %s34, 1
        %s645 = scalar_select %p644, %s34, 1
        %s646 = scalar_lea.vmem %s11, %s645
        %p647 = scmp.lt.s32.totalorder %s34, 1
        %s648 = scalar_select %p647, %s34, 1
        %s649 = smul.addr %s648, 8
        %s650 = smul.addr %s649, 4
        %s651 = scalar_lea.vmem %s12, %s650
        %p652 = scmp.lt.s32.totalorder %s34, 1
        %s653 = scalar_select %p652, %s34, 1
        %s654 = scalar_lea.vmem %s13, %s653
        %p656 = scmp.eq.s32.totalorder %s34, 0
        // Predicated region
        $region81: #{_lambda_.1} parent=75 // pred_check
          %p657 = pneg %p656
        $region82: #{_lambda_.1} parent=75 // pred_check_branch
          %659 = sbr.rel (%p657) target = $region84
        $region83: #{_lambda_.1} parent=75 // pred_region
          %v660 = vld [vmem:[%s615] sm:$0xff]
          %vm661 = vcmask 261120
          %662 = vst.msk [vmem:[#allocation2] sm:$0xff] %vm661, %v660
        $region84: #{_lambda_.1} parent=75 // pred_fallthru
          _
        %v663 = vld [vmem:[#allocation2] sm:$0xff]
        %v664 = vld [vmem:[%s618] sm:$0x1]
        %v665 = vmul.f32 %v663, %v663
        %vm666 = vcmask 261120
        %v667 = vsel %vm666, %v665, 0.0
        %668 = vadd.xlane.f32.xlu0 %v667
        %v669 = vpop.xlane.xlu0 %668
        %v670 = vrcp.pop 32.0
        %v671 = vmul.f32 %v669, %v670
        %v672 = vadd.f32 %v671, 1e-06
        %v673 = vrsqrt.pop %v672
        %v674 = vmul.f32 %v663, %v673
        %v676 = vlaneseq
        %v677 = vshrl.u32 %v676, 7
        %v678 = vsub.s32 0, %v677
        %v679 = vrot.slane %v664, %v678
        %v681 = vmul.f32 %v674, %v679
        %v682 = vpack.c.bf16 %v681, %v681
        %v683 = vld [vmem:[%s623] sm:$0xff]
        %v684 = vld [vmem:[%s623 + $0x8] sm:$0xff]
        %v685 = vld [vmem:[%s623 + $0x10] sm:$0xff]
        %v686 = vld [vmem:[%s623 + $0x18] sm:$0xff]
        %v687 = vld [vmem:[%s627] sm:$0x3]
        %v689 = vlaneseq
        %v690 = vshrl.u32 %v689, 7
        %v691 = vsub.s32 0, %v690
        %v692 = vrot.slane %v687, %v691
        %v693 = vlaneseq
        %v694 = vshrl.u32 %v693, 7
        %v695 = vsub.s32 1, %v694
        %v696 = vrot.slane %v687, %v695
        %v703 = vunpack.c.l.b16 %v683
        %v704 = vunpack.c.h.b16 %v683
        %v705 = vunpack.c.l.b16 %v684
        %v706 = vunpack.c.h.b16 %v684
        %v707 = vunpack.c.l.b16 %v685
        %v708 = vunpack.c.h.b16 %v685
        %v709 = vunpack.c.l.b16 %v686
        %v710 = vunpack.c.h.b16 %v686
        %v711 = vpack.c.b16 %v705, %v703
        %v712 = vpack.c.b16 %v706, %v704
        %v713 = vpack.c.b16 %v709, %v707
        %v714 = vpack.c.b16 %v710, %v708
        %v720 = vsel %vm666, %v682, 0
        %722 = vmatprep.subr.bf16.mxu0 %v712
        %723 = vmatpush1.bf16.msra.mxu0 %v711
        %724 = vmatprep.subr.bf16.mxu0 %v714
        %725 = vmatpush1.bf16.msra.mxu0 %v713
        %726 = vmatprep.subr.bf16.mxu0 0
        %727 = vmatpush1.bf16.msra.mxu0 0
        %728 = vmatprep.subr.bf16.mxu0 0
        %729 = vmatpush1.bf16.msra.mxu0 0
        %730 = vmatprep.subr.bf16.mxu0 0
        %731 = vmatpush1.bf16.msra.mxu0 0
        %732 = vmatprep.subr.bf16.mxu0 0
        %733 = vmatpush1.bf16.msra.mxu0 0
        %734 = vmatprep.subr.bf16.mxu0 0
        %735 = vmatpush1.bf16.msra.mxu0 0
        %736 = vmatprep.subr.bf16.mxu0 0
        %737 = vmatpush1.bf16.msra.mxu0 0
        %738 = vmatprep.subr.bf16.mxu0 0
        %739 = vmatpush1.bf16.msra.mxu0 0
        %740 = vmatprep.subr.bf16.mxu0 0
        %741 = vmatpush1.bf16.msra.mxu0 0
        %742 = vmatprep.subr.bf16.mxu0 0
        %743 = vmatpush1.bf16.msra.mxu0 0
        %744 = vmatprep.subr.bf16.mxu0 0
        %745 = vmatpush1.bf16.msra.mxu0 0
        %746 = vmatprep.subr.bf16.mxu0 0
        %747 = vmatpush1.bf16.msra.mxu0 0
        %748 = vmatprep.subr.bf16.mxu0 0
        %749 = vmatpush1.bf16.msra.mxu0 0
        %750 = vmatprep.subr.bf16.mxu0 0
        %751 = vmatpush1.bf16.msra.mxu0 0
        %752 = vmatprep.subr.bf16.mxu0 0
        %753 = vmatpush1.bf16.msra.mxu0 0
        %754 = vmatprep.mubr.bf16.mxu0 0
        %755 = vmatmul.mubr.bf16.gmra.mrb[0].mxu0 %v720
        %v756 = vpop.f32.mrb[0].mxu0
        %v757 = vadd.f32 %v692, %v756
        %v758 = vpop.f32.mrb[0].mxu0
        %v759 = vadd.f32 %v696, %v758
        %v760 = vpop.f32.mrb[0].mxu0
        %v761 = vpop.f32.mrb[0].mxu0
        %762 = vdwg.mxu0
        %v763 = vld [vmem:[#allocation3] sm:$0xff]
        %v764 = vld [vmem:[%s2] sm:$0xff]
        %v765 = vmul.f32 %v757, %v763
        %767 = vrot.lane.b32.xlu0 %v764, 96
        %v768 = vpop.permute.xlu0 %767
        %v770 = vmul.f32 %v757, %v768
        %772 = vrot.lane.b32.xlu0 %v770, 32
        %v773 = vpop.permute.xlu0 %772
        %v775 = vadd.f32 %v765, %v773
        %777 = vrot.lane.b32.xlu0 %v763, 32
        %v778 = vpop.permute.xlu0 %777
        %v780 = vmul.f32 %v757, %v778
        %v781 = vmul.f32 %v759, %v764
        %783 = vrot.lane.b32.xlu0 %v781, 32
        %v784 = vpop.permute.xlu0 %783
        %v786 = vadd.f32 %v780, %v784
        %v787 = vpack.c.bf16 %v775, %v775
        %v788 = vpack.c.bf16 %v786, %v786
        %v789 = vpack.c.bf16 %v757, %v757
        %v790 = vld [vmem:[%s632] sm:$0xf]
        %v791 = vld [vmem:[%s632 + $0x4] sm:$0xf]
        %v792 = vld [vmem:[%s632 + $0x8] sm:$0xf]
        %v793 = vld [vmem:[%s632 + $0xc] sm:$0xf]
        %795 = vrot.lane.b32.xlu0 %v788, 96
        %v796 = vpop.permute.xlu0 %795
        %vm797 = vcmask 64512
        %v799 = vsel %vm797, %v787, 0
        %v802 = vsel %vm797, %v796, 0
        %804 = vmatprep.subr.bf16.mxu0 0
        %805 = vmatpush1.bf16.xpose.msra.mxu0 %v802
        %806 = vmatprep.subr.bf16.mxu0 0
        %807 = vmatpush1.bf16.xpose.msra.mxu0 0
        %808 = vmatprep.subr.bf16.mxu0 0
        %809 = vmatpush1.bf16.xpose.msra.mxu0 0
        %810 = vmatprep.subr.bf16.mxu0 0
        %811 = vmatpush1.bf16.xpose.msra.mxu0 0
        %812 = vmatprep.subr.bf16.mxu0 0
        %813 = vmatpush1.bf16.xpose.msra.mxu0 0
        %814 = vmatprep.subr.bf16.mxu0 0
        %815 = vmatpush1.bf16.xpose.msra.mxu0 0
        %816 = vmatprep.subr.bf16.mxu0 0
        %817 = vmatpush1.bf16.xpose.msra.mxu0 0
        %818 = vmatprep.subr.bf16.mxu0 0
        %819 = vmatpush1.bf16.xpose.msra.mxu0 0
        %820 = vmatprep.subr.bf16.mxu0 0
        %821 = vmatpush1.bf16.xpose.msra.mxu0 0
        %822 = vmatprep.subr.bf16.mxu0 0
        %823 = vmatpush1.bf16.xpose.msra.mxu0 0
        %824 = vmatprep.subr.bf16.mxu0 0
        %825 = vmatpush1.bf16.xpose.msra.mxu0 0
        %826 = vmatprep.subr.bf16.mxu0 0
        %827 = vmatpush1.bf16.xpose.msra.mxu0 0
        %828 = vmatprep.subr.bf16.mxu0 0
        %829 = vmatpush1.bf16.xpose.msra.mxu0 0
        %830 = vmatprep.subr.bf16.mxu0 0
        %831 = vmatpush1.bf16.xpose.msra.mxu0 0
        %832 = vmatprep.subr.bf16.mxu0 0
        %833 = vmatpush1.bf16.xpose.msra.mxu0 0
        %834 = vmatprep.subr.bf16.mxu0 0
        %835 = vmatpush1.bf16.xpose.msra.mxu0 0
        %836 = vmatprep.mubr.bf16.mxu0 0
        %837 = vmatmul.mubr.bf16.gmra.mrb[0].mxu0 %v799
        %v838 = vpop.f32.mrb[0].mxu0
        %v839 = vadd.f32 0.0, %v838
        %v840 = vpop.f32.mrb[0].mxu0
        %v841 = vpop.f32.mrb[0].mxu0
        %v842 = vpop.f32.mrb[0].mxu0
        %843 = vdwg.mxu0
        %v844 = vmul.f32 %v839, 0.35355338
        %v845 = vsel %vm797, %v844, -inf
        %846 = vmax.xlane.f32.xlu0 %v845
        %v847 = vpop.xlane.xlu0 %846
        %v848 = vsub.f32 %v844, %v847
        %v849 = vmul.f32 %v848, 1.442695
        %v850 = vpow.pop %v849
        %v851 = vsel %vm797, %v850, 0.0
        %852 = vadd.xlane.f32.xlu0 %v851
        %v853 = vpop.xlane.xlu0 %852
        %v854 = vrcp.pop %v853
        %v855 = vmul.f32 %v850, %v854
        %v856 = vpack.c.bf16 %v855, %v855
        %858 = vrot.lane.b32.xlu0 %v789, 64
        %v859 = vpop.permute.xlu0 %858
        %v861 = vsel %vm797, %v856, 0
        %vm863 = vcmask 1043456
        %v865 = vsel %vm863, %v859, 0
        %867 = vmatprep.subr.bf16.mxu0 0
        %868 = vmatpush1.bf16.msra.mxu0 %v865
        %869 = vmatprep.subr.bf16.mxu0 0
        %870 = vmatpush1.bf16.msra.mxu0 0
        %871 = vmatprep.subr.bf16.mxu0 0
        %872 = vmatpush1.bf16.msra.mxu0 0
        %873 = vmatprep.subr.bf16.mxu0 0
        %874 = vmatpush1.bf16.msra.mxu0 0
        %875 = vmatprep.subr.bf16.mxu0 0
        %876 = vmatpush1.bf16.msra.mxu0 0
        %877 = vmatprep.subr.bf16.mxu0 0
        %878 = vmatpush1.bf16.msra.mxu0 0
        %879 = vmatprep.subr.bf16.mxu0 0
        %880 = vmatpush1.bf16.msra.mxu0 0
        %881 = vmatprep.subr.bf16.mxu0 0
        %882 = vmatpush1.bf16.msra.mxu0 0
        %883 = vmatprep.subr.bf16.mxu0 0
        %884 = vmatpush1.bf16.msra.mxu0 0
        %885 = vmatprep.subr.bf16.mxu0 0
        %886 = vmatpush1.bf16.msra.mxu0 0
        %887 = vmatprep.subr.bf16.mxu0 0
        %888 = vmatpush1.bf16.msra.mxu0 0
        %889 = vmatprep.subr.bf16.mxu0 0
        %890 = vmatpush1.bf16.msra.mxu0 0
        %891 = vmatprep.subr.bf16.mxu0 0
        %892 = vmatpush1.bf16.msra.mxu0 0
        %893 = vmatprep.subr.bf16.mxu0 0
        %894 = vmatpush1.bf16.msra.mxu0 0
        %895 = vmatprep.subr.bf16.mxu0 0
        %896 = vmatpush1.bf16.msra.mxu0 0
        %897 = vmatprep.subr.bf16.mxu0 0
        %898 = vmatpush1.bf16.msra.mxu0 0
        %899 = vmatprep.mubr.bf16.mxu0 0
        %900 = vmatmul.mubr.bf16.gmra.mrb[0].mxu0 %v861
        %v901 = vpop.f32.mrb[0].mxu0
        %v902 = vadd.f32 0.0, %v901
        %v903 = vpop.f32.mrb[0].mxu0
        %v904 = vpop.f32.mrb[0].mxu0
        %v905 = vpop.f32.mrb[0].mxu0
        %906 = vdwg.mxu0
        %v907 = vpack.c.bf16 %v902, %v902
        %909 = vrot.lane.b32.xlu0 %v787, 120
        %v910 = vpop.permute.xlu0 %909
        %911 = vrot.lane.b32.xlu0 %v788, 88
        %v912 = vpop.permute.xlu0 %911
        %v914 = vsel %vm797, %v910, 0
        %v917 = vsel %vm797, %v912, 0
        %919 = vmatprep.subr.bf16.mxu0 0
        %920 = vmatpush1.bf16.xpose.msra.mxu0 %v917
        %921 = vmatprep.subr.bf16.mxu0 0
        %922 = vmatpush1.bf16.xpose.msra.mxu0 0
        %923 = vmatprep.subr.bf16.mxu0 0
        %924 = vmatpush1.bf16.xpose.msra.mxu0 0
        %925 = vmatprep.subr.bf16.mxu0 0
        %926 = vmatpush1.bf16.xpose.msra.mxu0 0
        %927 = vmatprep.subr.bf16.mxu0 0
        %928 = vmatpush1.bf16.xpose.msra.mxu0 0
        %929 = vmatprep.subr.bf16.mxu0 0
        %930 = vmatpush1.bf16.xpose.msra.mxu0 0
        %931 = vmatprep.subr.bf16.mxu0 0
        %932 = vmatpush1.bf16.xpose.msra.mxu0 0
        %933 = vmatprep.subr.bf16.mxu0 0
        %934 = vmatpush1.bf16.xpose.msra.mxu0 0
        %935 = vmatprep.subr.bf16.mxu0 0
        %936 = vmatpush1.bf16.xpose.msra.mxu0 0
        %937 = vmatprep.subr.bf16.mxu0 0
        %938 = vmatpush1.bf16.xpose.msra.mxu0 0
        %939 = vmatprep.subr.bf16.mxu0 0
        %940 = vmatpush1.bf16.xpose.msra.mxu0 0
        %941 = vmatprep.subr.bf16.mxu0 0
        %942 = vmatpush1.bf16.xpose.msra.mxu0 0
        %943 = vmatprep.subr.bf16.mxu0 0
        %944 = vmatpush1.bf16.xpose.msra.mxu0 0
        %945 = vmatprep.subr.bf16.mxu0 0
        %946 = vmatpush1.bf16.xpose.msra.mxu0 0
        %947 = vmatprep.subr.bf16.mxu0 0
        %948 = vmatpush1.bf16.xpose.msra.mxu0 0
        %949 = vmatprep.subr.bf16.mxu0 0
        %950 = vmatpush1.bf16.xpose.msra.mxu0 0
        %951 = vmatprep.mubr.bf16.mxu0 0
        %952 = vmatmul.mubr.bf16.gmra.mrb[0].mxu0 %v914
        %v953 = vpop.f32.mrb[0].mxu0
        %v954 = vadd.f32 0.0, %v953
        %v955 = vpop.f32.mrb[0].mxu0
        %v956 = vpop.f32.mrb[0].mxu0
        %v957 = vpop.f32.mrb[0].mxu0
        %958 = vdwg.mxu0
        %v959 = vmul.f32 %v954, 0.35355338
        %v960 = vsel %vm797, %v959, -inf
        %961 = vmax.xlane.f32.xlu0 %v960
        %v962 = vpop.xlane.xlu0 %961
        %v963 = vsub.f32 %v959, %v962
        %v964 = vmul.f32 %v963, 1.442695
        %v965 = vpow.pop %v964
        %v966 = vsel %vm797, %v965, 0.0
        %967 = vadd.xlane.f32.xlu0 %v966
        %v968 = vpop.xlane.xlu0 %967
        %v969 = vrcp.pop %v968
        %v970 = vmul.f32 %v965, %v969
        %v971 = vpack.c.bf16 %v970, %v970
        %972 = vrot.lane.b32.xlu0 %v789, 56
        %v973 = vpop.permute.xlu0 %972
        %v975 = vsel %vm797, %v971, 0
        %v978 = vsel %vm863, %v973, 0
        %980 = vmatprep.subr.bf16.mxu0 0
        %981 = vmatpush1.bf16.msra.mxu0 %v978
        %982 = vmatprep.subr.bf16.mxu0 0
        %983 = vmatpush1.bf16.msra.mxu0 0
        %984 = vmatprep.subr.bf16.mxu0 0
        %985 = vmatpush1.bf16.msra.mxu0 0
        %986 = vmatprep.subr.bf16.mxu0 0
        %987 = vmatpush1.bf16.msra.mxu0 0
        %988 = vmatprep.subr.bf16.mxu0 0
        %989 = vmatpush1.bf16.msra.mxu0 0
        %990 = vmatprep.subr.bf16.mxu0 0
        %991 = vmatpush1.bf16.msra.mxu0 0
        %992 = vmatprep.subr.bf16.mxu0 0
        %993 = vmatpush1.bf16.msra.mxu0 0
        %994 = vmatprep.subr.bf16.mxu0 0
        %995 = vmatpush1.bf16.msra.mxu0 0
        %996 = vmatprep.subr.bf16.mxu0 0
        %997 = vmatpush1.bf16.msra.mxu0 0
        %998 = vmatprep.subr.bf16.mxu0 0
        %999 = vmatpush1.bf16.msra.mxu0 0
        %1000 = vmatprep.subr.bf16.mxu0 0
        %1001 = vmatpush1.bf16.msra.mxu0 0
        %1002 = vmatprep.subr.bf16.mxu0 0
        %1003 = vmatpush1.bf16.msra.mxu0 0
        %1004 = vmatprep.subr.bf16.mxu0 0
        %1005 = vmatpush1.bf16.msra.mxu0 0
        %1006 = vmatprep.subr.bf16.mxu0 0
        %1007 = vmatpush1.bf16.msra.mxu0 0
        %1008 = vmatprep.subr.bf16.mxu0 0
        %1009 = vmatpush1.bf16.msra.mxu0 0
        %1010 = vmatprep.subr.bf16.mxu0 0
        %1011 = vmatpush1.bf16.msra.mxu0 0
        %1012 = vmatprep.mubr.bf16.mxu0 0
        %1013 = vmatmul.mubr.bf16.gmra.mrb[0].mxu0 %v975
        %v1014 = vpop.f32.mrb[0].mxu0
        %v1015 = vadd.f32 0.0, %v1014
        %v1016 = vpop.f32.mrb[0].mxu0
        %v1017 = vpop.f32.mrb[0].mxu0
        %v1018 = vpop.f32.mrb[0].mxu0
        %1019 = vdwg.mxu0
        %v1020 = vpack.c.bf16 %v1015, %v1015
        %v1022 = vsel %vm797, %v1020, 0
        %v1025 = vsel %vm863, %v791, 0
        %1027 = vmatprep.subr.bf16.mxu0 0
        %1028 = vmatpush1.bf16.msra.mxu0 %v1025
        %1029 = vmatprep.subr.bf16.mxu0 0
        %1030 = vmatpush1.bf16.msra.mxu0 0
        %1031 = vmatprep.subr.bf16.mxu0 0
        %1032 = vmatpush1.bf16.msra.mxu0 0
        %1033 = vmatprep.subr.bf16.mxu0 0
        %1034 = vmatpush1.bf16.msra.mxu0 0
        %1035 = vmatprep.subr.bf16.mxu0 0
        %1036 = vmatpush1.bf16.msra.mxu0 0
        %1037 = vmatprep.subr.bf16.mxu0 0
        %1038 = vmatpush1.bf16.msra.mxu0 0
        %1039 = vmatprep.subr.bf16.mxu0 0
        %1040 = vmatpush1.bf16.msra.mxu0 0
        %1041 = vmatprep.subr.bf16.mxu0 0
        %1042 = vmatpush1.bf16.msra.mxu0 0
        %1043 = vmatprep.subr.bf16.mxu0 0
        %1044 = vmatpush1.bf16.msra.mxu0 0
        %1045 = vmatprep.subr.bf16.mxu0 0
        %1046 = vmatpush1.bf16.msra.mxu0 0
        %1047 = vmatprep.subr.bf16.mxu0 0
        %1048 = vmatpush1.bf16.msra.mxu0 0
        %1049 = vmatprep.subr.bf16.mxu0 0
        %1050 = vmatpush1.bf16.msra.mxu0 0
        %1051 = vmatprep.subr.bf16.mxu0 0
        %1052 = vmatpush1.bf16.msra.mxu0 0
        %1053 = vmatprep.subr.bf16.mxu0 0
        %1054 = vmatpush1.bf16.msra.mxu0 0
        %1055 = vmatprep.subr.bf16.mxu0 0
        %1056 = vmatpush1.bf16.msra.mxu0 0
        %1057 = vmatprep.subr.bf16.mxu0 0
        %1058 = vmatpush1.bf16.msra.mxu0 0
        %1059 = vmatprep.mubr.bf16.mxu0 0
        %1060 = vmatmul.mubr.bf16.gmra.mrb[0].mxu0 %v1022
        %v1061 = vpop.f32.mrb[0].mxu0
        %v1062 = vadd.f32 0.0, %v1061
        %v1063 = vpop.f32.mrb[0].mxu0
        %v1064 = vpop.f32.mrb[0].mxu0
        %v1065 = vpop.f32.mrb[0].mxu0
        %1066 = vdwg.mxu0
        %v1068 = vsel %vm797, %v907, 0
        %v1071 = vsel %vm863, %v790, 0
        %1073 = vmatprep.subr.bf16.mxu0 0
        %1074 = vmatpush1.bf16.msra.mxu0 %v1071
        %1075 = vmatprep.subr.bf16.mxu0 0
        %1076 = vmatpush1.bf16.msra.mxu0 0
        %1077 = vmatprep.subr.bf16.mxu0 0
        %1078 = vmatpush1.bf16.msra.mxu0 0
        %1079 = vmatprep.subr.bf16.mxu0 0
        %1080 = vmatpush1.bf16.msra.mxu0 0
        %1081 = vmatprep.subr.bf16.mxu0 0
        %1082 = vmatpush1.bf16.msra.mxu0 0
        %1083 = vmatprep.subr.bf16.mxu0 0
        %1084 = vmatpush1.bf16.msra.mxu0 0
        %1085 = vmatprep.subr.bf16.mxu0 0
        %1086 = vmatpush1.bf16.msra.mxu0 0
        %1087 = vmatprep.subr.bf16.mxu0 0
        %1088 = vmatpush1.bf16.msra.mxu0 0
        %1089 = vmatprep.subr.bf16.mxu0 0
        %1090 = vmatpush1.bf16.msra.mxu0 0
        %1091 = vmatprep.subr.bf16.mxu0 0
        %1092 = vmatpush1.bf16.msra.mxu0 0
        %1093 = vmatprep.subr.bf16.mxu0 0
        %1094 = vmatpush1.bf16.msra.mxu0 0
        %1095 = vmatprep.subr.bf16.mxu0 0
        %1096 = vmatpush1.bf16.msra.mxu0 0
        %1097 = vmatprep.subr.bf16.mxu0 0
        %1098 = vmatpush1.bf16.msra.mxu0 0
        %1099 = vmatprep.subr.bf16.mxu0 0
        %1100 = vmatpush1.bf16.msra.mxu0 0
        %1101 = vmatprep.subr.bf16.mxu0 0
        %1102 = vmatpush1.bf16.msra.mxu0 0
        %1103 = vmatprep.subr.bf16.mxu0 0
        %1104 = vmatpush1.bf16.msra.mxu0 0
        %1105 = vmatprep.mubr.bf16.mxu0 0
        %1106 = vmatmul.mubr.bf16.gmra.mrb[0].mxu0 %v1068
        %v1107 = vpop.f32.mrb[0].mxu0
        %v1108 = vadd.f32 %v1062, %v1107
        %v1109 = vpop.f32.mrb[0].mxu0
        %v1110 = vpop.f32.mrb[0].mxu0
        %v1111 = vpop.f32.mrb[0].mxu0
        %1112 = vdwg.mxu0
        %1113 = vrot.lane.b32.xlu0 %v787, 112
        %v1114 = vpop.permute.xlu0 %1113
        %1115 = vrot.lane.b32.xlu0 %v788, 80
        %v1116 = vpop.permute.xlu0 %1115
        %v1118 = vsel %vm797, %v1114, 0
        %v1121 = vsel %vm797, %v1116, 0
        %1123 = vmatprep.subr.bf16.mxu0 0
        %1124 = vmatpush1.bf16.xpose.msra.mxu0 %v1121
        %1125 = vmatprep.subr.bf16.mxu0 0
        %1126 = vmatpush1.bf16.xpose.msra.mxu0 0
        %1127 = vmatprep.subr.bf16.mxu0 0
        %1128 = vmatpush1.bf16.xpose.msra.mxu0 0
        %1129 = vmatprep.subr.bf16.mxu0 0
        %1130 = vmatpush1.bf16.xpose.msra.mxu0 0
        %1131 = vmatprep.subr.bf16.mxu0 0
        %1132 = vmatpush1.bf16.xpose.msra.mxu0 0
        %1133 = vmatprep.subr.bf16.mxu0 0
        %1134 = vmatpush1.bf16.xpose.msra.mxu0 0
        %1135 = vmatprep.subr.bf16.mxu0 0
        %1136 = vmatpush1.bf16.xpose.msra.mxu0 0
        %1137 = vmatprep.subr.bf16.mxu0 0
        %1138 = vmatpush1.bf16.xpose.msra.mxu0 0
        %1139 = vmatprep.subr.bf16.mxu0 0
        %1140 = vmatpush1.bf16.xpose.msra.mxu0 0
        %1141 = vmatprep.subr.bf16.mxu0 0
        %1142 = vmatpush1.bf16.xpose.msra.mxu0 0
        %1143 = vmatprep.subr.bf16.mxu0 0
        %1144 = vmatpush1.bf16.xpose.msra.mxu0 0
        %1145 = vmatprep.subr.bf16.mxu0 0
        %1146 = vmatpush1.bf16.xpose.msra.mxu0 0
        %1147 = vmatprep.subr.bf16.mxu0 0
        %1148 = vmatpush1.bf16.xpose.msra.mxu0 0
        %1149 = vmatprep.subr.bf16.mxu0 0
        %1150 = vmatpush1.bf16.xpose.msra.mxu0 0
        %1151 = vmatprep.subr.bf16.mxu0 0
        %1152 = vmatpush1.bf16.xpose.msra.mxu0 0
        %1153 = vmatprep.subr.bf16.mxu0 0
        %1154 = vmatpush1.bf16.xpose.msra.mxu0 0
        %1155 = vmatprep.mubr.bf16.mxu0 0
        %1156 = vmatmul.mubr.bf16.gmra.mrb[0].mxu0 %v1118
        %v1157 = vpop.f32.mrb[0].mxu0
        %v1158 = vadd.f32 0.0, %v1157
        %v1159 = vpop.f32.mrb[0].mxu0
        %v1160 = vpop.f32.mrb[0].mxu0
        %v1161 = vpop.f32.mrb[0].mxu0
        %1162 = vdwg.mxu0
        %v1163 = vmul.f32 %v1158, 0.35355338
        %v1164 = vsel %vm797, %v1163, -inf
        %1165 = vmax.xlane.f32.xlu0 %v1164
        %v1166 = vpop.xlane.xlu0 %1165
        %v1167 = vsub.f32 %v1163, %v1166
        %v1168 = vmul.f32 %v1167, 1.442695
        %v1169 = vpow.pop %v1168
        %v1170 = vsel %vm797, %v1169, 0.0
        %1171 = vadd.xlane.f32.xlu0 %v1170
        %v1172 = vpop.xlane.xlu0 %1171
        %v1173 = vrcp.pop %v1172
        %v1174 = vmul.f32 %v1169, %v1173
        %v1175 = vpack.c.bf16 %v1174, %v1174
        %1176 = vrot.lane.b32.xlu0 %v789, 48
        %v1177 = vpop.permute.xlu0 %1176
        %v1179 = vsel %vm797, %v1175, 0
        %v1182 = vsel %vm863, %v1177, 0
        %1184 = vmatprep.subr.bf16.mxu0 0
        %1185 = vmatpush1.bf16.msra.mxu0 %v1182
        %1186 = vmatprep.subr.bf16.mxu0 0
        %1187 = vmatpush1.bf16.msra.mxu0 0
        %1188 = vmatprep.subr.bf16.mxu0 0
        %1189 = vmatpush1.bf16.msra.mxu0 0
        %1190 = vmatprep.subr.bf16.mxu0 0
        %1191 = vmatpush1.bf16.msra.mxu0 0
        %1192 = vmatprep.subr.bf16.mxu0 0
        %1193 = vmatpush1.bf16.msra.mxu0 0
        %1194 = vmatprep.subr.bf16.mxu0 0
        %1195 = vmatpush1.bf16.msra.mxu0 0
        %1196 = vmatprep.subr.bf16.mxu0 0
        %1197 = vmatpush1.bf16.msra.mxu0 0
        %1198 = vmatprep.subr.bf16.mxu0 0
        %1199 = vmatpush1.bf16.msra.mxu0 0
        %1200 = vmatprep.subr.bf16.mxu0 0
        %1201 = vmatpush1.bf16.msra.mxu0 0
        %1202 = vmatprep.subr.bf16.mxu0 0
        %1203 = vmatpush1.bf16.msra.mxu0 0
        %1204 = vmatprep.subr.bf16.mxu0 0
        %1205 = vmatpush1.bf16.msra.mxu0 0
        %1206 = vmatprep.subr.bf16.mxu0 0
        %1207 = vmatpush1.bf16.msra.mxu0 0
        %1208 = vmatprep.subr.bf16.mxu0 0
        %1209 = vmatpush1.bf16.msra.mxu0 0
        %1210 = vmatprep.subr.bf16.mxu0 0
        %1211 = vmatpush1.bf16.msra.mxu0 0
        %1212 = vmatprep.subr.bf16.mxu0 0
        %1213 = vmatpush1.bf16.msra.mxu0 0
        %1214 = vmatprep.subr.bf16.mxu0 0
        %1215 = vmatpush1.bf16.msra.mxu0 0
        %1216 = vmatprep.mubr.bf16.mxu0 0
        %1217 = vmatmul.mubr.bf16.gmra.mrb[0].mxu0 %v1179
        %v1218 = vpop.f32.mrb[0].mxu0
        %v1219 = vadd.f32 0.0, %v1218
        %v1220 = vpop.f32.mrb[0].mxu0
        %v1221 = vpop.f32.mrb[0].mxu0
        %v1222 = vpop.f32.mrb[0].mxu0
        %1223 = vdwg.mxu0
        %v1224 = vpack.c.bf16 %v1219, %v1219
        %v1226 = vsel %vm797, %v1224, 0
        %v1229 = vsel %vm863, %v792, 0
        %1231 = vmatprep.subr.bf16.mxu0 0
        %1232 = vmatpush1.bf16.msra.mxu0 %v1229
        %1233 = vmatprep.subr.bf16.mxu0 0
        %1234 = vmatpush1.bf16.msra.mxu0 0
        %1235 = vmatprep.subr.bf16.mxu0 0
        %1236 = vmatpush1.bf16.msra.mxu0 0
        %1237 = vmatprep.subr.bf16.mxu0 0
        %1238 = vmatpush1.bf16.msra.mxu0 0
        %1239 = vmatprep.subr.bf16.mxu0 0
        %1240 = vmatpush1.bf16.msra.mxu0 0
        %1241 = vmatprep.subr.bf16.mxu0 0
        %1242 = vmatpush1.bf16.msra.mxu0 0
        %1243 = vmatprep.subr.bf16.mxu0 0
        %1244 = vmatpush1.bf16.msra.mxu0 0
        %1245 = vmatprep.subr.bf16.mxu0 0
        %1246 = vmatpush1.bf16.msra.mxu0 0
        %1247 = vmatprep.subr.bf16.mxu0 0
        %1248 = vmatpush1.bf16.msra.mxu0 0
        %1249 = vmatprep.subr.bf16.mxu0 0
        %1250 = vmatpush1.bf16.msra.mxu0 0
        %1251 = vmatprep.subr.bf16.mxu0 0
        %1252 = vmatpush1.bf16.msra.mxu0 0
        %1253 = vmatprep.subr.bf16.mxu0 0
        %1254 = vmatpush1.bf16.msra.mxu0 0
        %1255 = vmatprep.subr.bf16.mxu0 0
        %1256 = vmatpush1.bf16.msra.mxu0 0
        %1257 = vmatprep.subr.bf16.mxu0 0
        %1258 = vmatpush1.bf16.msra.mxu0 0
        %1259 = vmatprep.subr.bf16.mxu0 0
        %1260 = vmatpush1.bf16.msra.mxu0 0
        %1261 = vmatprep.subr.bf16.mxu0 0
        %1262 = vmatpush1.bf16.msra.mxu0 0
        %1263 = vmatprep.mubr.bf16.mxu0 0
        %1264 = vmatmul.mubr.bf16.gmra.mrb[0].mxu0 %v1226
        %v1265 = vpop.f32.mrb[0].mxu0
        %v1266 = vadd.f32 0.0, %v1265
        %v1267 = vpop.f32.mrb[0].mxu0
        %v1268 = vpop.f32.mrb[0].mxu0
        %v1269 = vpop.f32.mrb[0].mxu0
        %1270 = vdwg.mxu0
        %v1271 = vadd.f32 %v1108, %v1266
        %1272 = vrot.lane.b32.xlu0 %v787, 104
        %v1273 = vpop.permute.xlu0 %1272
        %1274 = vrot.lane.b32.xlu0 %v788, 72
        %v1275 = vpop.permute.xlu0 %1274
        %v1277 = vsel %vm797, %v1273, 0
        %v1280 = vsel %vm797, %v1275, 0
        %1282 = vmatprep.subr.bf16.mxu0 0
        %1283 = vmatpush1.bf16.xpose.msra.mxu0 %v1280
        %1284 = vmatprep.subr.bf16.mxu0 0
        %1285 = vmatpush1.bf16.xpose.msra.mxu0 0
        %1286 = vmatprep.subr.bf16.mxu0 0
        %1287 = vmatpush1.bf16.xpose.msra.mxu0 0
        %1288 = vmatprep.subr.bf16.mxu0 0
        %1289 = vmatpush1.bf16.xpose.msra.mxu0 0
        %1290 = vmatprep.subr.bf16.mxu0 0
        %1291 = vmatpush1.bf16.xpose.msra.mxu0 0
        %1292 = vmatprep.subr.bf16.mxu0 0
        %1293 = vmatpush1.bf16.xpose.msra.mxu0 0
        %1294 = vmatprep.subr.bf16.mxu0 0
        %1295 = vmatpush1.bf16.xpose.msra.mxu0 0
        %1296 = vmatprep.subr.bf16.mxu0 0
        %1297 = vmatpush1.bf16.xpose.msra.mxu0 0
        %1298 = vmatprep.subr.bf16.mxu0 0
        %1299 = vmatpush1.bf16.xpose.msra.mxu0 0
        %1300 = vmatprep.subr.bf16.mxu0 0
        %1301 = vmatpush1.bf16.xpose.msra.mxu0 0
        %1302 = vmatprep.subr.bf16.mxu0 0
        %1303 = vmatpush1.bf16.xpose.msra.mxu0 0
        %1304 = vmatprep.subr.bf16.mxu0 0
        %1305 = vmatpush1.bf16.xpose.msra.mxu0 0
        %1306 = vmatprep.subr.bf16.mxu0 0
        %1307 = vmatpush1.bf16.xpose.msra.mxu0 0
        %1308 = vmatprep.subr.bf16.mxu0 0
        %1309 = vmatpush1.bf16.xpose.msra.mxu0 0
        %1310 = vmatprep.subr.bf16.mxu0 0
        %1311 = vmatpush1.bf16.xpose.msra.mxu0 0
        %1312 = vmatprep.subr.bf16.mxu0 0
        %1313 = vmatpush1.bf16.xpose.msra.mxu0 0
        %1314 = vmatprep.mubr.bf16.mxu0 0
        %1315 = vmatmul.mubr.bf16.gmra.mrb[0].mxu0 %v1277
        %v1316 = vpop.f32.mrb[0].mxu0
        %v1317 = vadd.f32 0.0, %v1316
        %v1318 = vpop.f32.mrb[0].mxu0
        %v1319 = vpop.f32.mrb[0].mxu0
        %v1320 = vpop.f32.mrb[0].mxu0
        %1321 = vdwg.mxu0
        %v1322 = vmul.f32 %v1317, 0.35355338
        %v1323 = vsel %vm797, %v1322, -inf
        %1324 = vmax.xlane.f32.xlu0 %v1323
        %v1325 = vpop.xlane.xlu0 %1324
        %v1326 = vsub.f32 %v1322, %v1325
        %v1327 = vmul.f32 %v1326, 1.442695
        %v1328 = vpow.pop %v1327
        %v1329 = vsel %vm797, %v1328, 0.0
        %1330 = vadd.xlane.f32.xlu0 %v1329
        %v1331 = vpop.xlane.xlu0 %1330
        %v1332 = vrcp.pop %v1331
        %v1333 = vmul.f32 %v1328, %v1332
        %v1334 = vpack.c.bf16 %v1333, %v1333
        %1335 = vrot.lane.b32.xlu0 %v789, 40
        %v1336 = vpop.permute.xlu0 %1335
        %v1338 = vsel %vm797, %v1334, 0
        %v1341 = vsel %vm863, %v1336, 0
        %1343 = vmatprep.subr.bf16.mxu0 0
        %1344 = vmatpush1.bf16.msra.mxu0 %v1341
        %1345 = vmatprep.subr.bf16.mxu0 0
        %1346 = vmatpush1.bf16.msra.mxu0 0
        %1347 = vmatprep.subr.bf16.mxu0 0
        %1348 = vmatpush1.bf16.msra.mxu0 0
        %1349 = vmatprep.subr.bf16.mxu0 0
        %1350 = vmatpush1.bf16.msra.mxu0 0
        %1351 = vmatprep.subr.bf16.mxu0 0
        %1352 = vmatpush1.bf16.msra.mxu0 0
        %1353 = vmatprep.subr.bf16.mxu0 0
        %1354 = vmatpush1.bf16.msra.mxu0 0
        %1355 = vmatprep.subr.bf16.mxu0 0
        %1356 = vmatpush1.bf16.msra.mxu0 0
        %1357 = vmatprep.subr.bf16.mxu0 0
        %1358 = vmatpush1.bf16.msra.mxu0 0
        %1359 = vmatprep.subr.bf16.mxu0 0
        %1360 = vmatpush1.bf16.msra.mxu0 0
        %1361 = vmatprep.subr.bf16.mxu0 0
        %1362 = vmatpush1.bf16.msra.mxu0 0
        %1363 = vmatprep.subr.bf16.mxu0 0
        %1364 = vmatpush1.bf16.msra.mxu0 0
        %1365 = vmatprep.subr.bf16.mxu0 0
        %1366 = vmatpush1.bf16.msra.mxu0 0
        %1367 = vmatprep.subr.bf16.mxu0 0
        %1368 = vmatpush1.bf16.msra.mxu0 0
        %1369 = vmatprep.subr.bf16.mxu0 0
        %1370 = vmatpush1.bf16.msra.mxu0 0
        %1371 = vmatprep.subr.bf16.mxu0 0
        %1372 = vmatpush1.bf16.msra.mxu0 0
        %1373 = vmatprep.subr.bf16.mxu0 0
        %1374 = vmatpush1.bf16.msra.mxu0 0
        %1375 = vmatprep.mubr.bf16.mxu0 0
        %1376 = vmatmul.mubr.bf16.gmra.mrb[0].mxu0 %v1338
        %v1377 = vpop.f32.mrb[0].mxu0
        %v1378 = vadd.f32 0.0, %v1377
        %v1379 = vpop.f32.mrb[0].mxu0
        %v1380 = vpop.f32.mrb[0].mxu0
        %v1381 = vpop.f32.mrb[0].mxu0
        %1382 = vdwg.mxu0
        %v1383 = vpack.c.bf16 %v1378, %v1378
        %v1385 = vsel %vm797, %v1383, 0
        %v1388 = vsel %vm863, %v793, 0
        %1390 = vmatprep.subr.bf16.mxu0 0
        %1391 = vmatpush1.bf16.msra.mxu0 %v1388
        %1392 = vmatprep.subr.bf16.mxu0 0
        %1393 = vmatpush1.bf16.msra.mxu0 0
        %1394 = vmatprep.subr.bf16.mxu0 0
        %1395 = vmatpush1.bf16.msra.mxu0 0
        %1396 = vmatprep.subr.bf16.mxu0 0
        %1397 = vmatpush1.bf16.msra.mxu0 0
        %1398 = vmatprep.subr.bf16.mxu0 0
        %1399 = vmatpush1.bf16.msra.mxu0 0
        %1400 = vmatprep.subr.bf16.mxu0 0
        %1401 = vmatpush1.bf16.msra.mxu0 0
        %1402 = vmatprep.subr.bf16.mxu0 0
        %1403 = vmatpush1.bf16.msra.mxu0 0
        %1404 = vmatprep.subr.bf16.mxu0 0
        %1405 = vmatpush1.bf16.msra.mxu0 0
        %1406 = vmatprep.subr.bf16.mxu0 0
        %1407 = vmatpush1.bf16.msra.mxu0 0
        %1408 = vmatprep.subr.bf16.mxu0 0
        %1409 = vmatpush1.bf16.msra.mxu0 0
        %1410 = vmatprep.subr.bf16.mxu0 0
        %1411 = vmatpush1.bf16.msra.mxu0 0
        %1412 = vmatprep.subr.bf16.mxu0 0
        %1413 = vmatpush1.bf16.msra.mxu0 0
        %1414 = vmatprep.subr.bf16.mxu0 0
        %1415 = vmatpush1.bf16.msra.mxu0 0
        %1416 = vmatprep.subr.bf16.mxu0 0
        %1417 = vmatpush1.bf16.msra.mxu0 0
        %1418 = vmatprep.subr.bf16.mxu0 0
        %1419 = vmatpush1.bf16.msra.mxu0 0
        %1420 = vmatprep.subr.bf16.mxu0 0
        %1421 = vmatpush1.bf16.msra.mxu0 0
        %1422 = vmatprep.mubr.bf16.mxu0 0
        %1423 = vmatmul.mubr.bf16.gmra.mrb[0].mxu0 %v1385
        %v1424 = vpop.f32.mrb[0].mxu0
        %v1425 = vadd.f32 0.0, %v1424
        %v1426 = vpop.f32.mrb[0].mxu0
        %v1427 = vpop.f32.mrb[0].mxu0
        %v1428 = vpop.f32.mrb[0].mxu0
        %1429 = vdwg.mxu0
        %v1430 = vadd.f32 %v1271, %v1425
        %v1431 = vadd.f32 %v663, %v1430
        %v1432 = vld [vmem:[%s635] sm:$0x1]
        %v1434 = vlaneseq
        %v1435 = vshrl.u32 %v1434, 7
        %v1436 = vsub.s32 0, %v1435
        %v1437 = vrot.slane %v1432, %v1436
        %v1439 = vadd.f32 %v1431, %v1437
        %v1440 = vld [vmem:[%s638] sm:$0x1]
        %v1441 = vmul.f32 %v1439, %v1439
        %v1442 = vsel %vm666, %v1441, 0.0
        %1443 = vadd.xlane.f32.xlu0 %v1442
        %v1444 = vpop.xlane.xlu0 %1443
        %v1445 = vmul.f32 %v1444, %v670
        %v1446 = vadd.f32 %v1445, 1e-06
        %v1447 = vrsqrt.pop %v1446
        %v1448 = vmul.f32 %v1439, %v1447
        %v1450 = vlaneseq
        %v1451 = vshrl.u32 %v1450, 7
        %v1452 = vsub.s32 0, %v1451
        %v1453 = vrot.slane %v1440, %v1452
        %v1455 = vmul.f32 %v1448, %v1453
        %v1456 = vpack.c.bf16 %v1455, %v1455
        %v1457 = vld [vmem:[%s643] sm:$0xf]
        %v1458 = vld [vmem:[%s643 + $0x4] sm:$0xf]
        %v1459 = vld [vmem:[%s643 + $0x8] sm:$0xf]
        %v1460 = vld [vmem:[%s643 + $0xc] sm:$0xf]
        %v1461 = vld [vmem:[%s646] sm:$0x1]
        %v1463 = vlaneseq
        %v1464 = vshrl.u32 %v1463, 7
        %v1465 = vsub.s32 0, %v1464
        %v1466 = vrot.slane %v1461, %v1465
        %v1472 = vunpack.c.l.b16 %v1457
        %v1473 = vunpack.c.l.b16 %v1458
        %v1474 = vunpack.c.l.b16 %v1459
        %v1475 = vunpack.c.l.b16 %v1460
        %v1476 = vpack.c.b16 %v1473, %v1472
        %v1477 = vpack.c.b16 %v1475, %v1474
        %v1481 = vsel %vm666, %v1456, 0
        %1483 = vmatprep.subr.bf16.mxu0 0
        %1484 = vmatpush1.bf16.msra.mxu0 %v1476
        %1485 = vmatprep.subr.bf16.mxu0 0
        %1486 = vmatpush1.bf16.msra.mxu0 %v1477
        %1487 = vmatprep.subr.bf16.mxu0 0
        %1488 = vmatpush1.bf16.msra.mxu0 0
        %1489 = vmatprep.subr.bf16.mxu0 0
        %1490 = vmatpush1.bf16.msra.mxu0 0
        %1491 = vmatprep.subr.bf16.mxu0 0
        %1492 = vmatpush1.bf16.msra.mxu0 0
        %1493 = vmatprep.subr.bf16.mxu0 0
        %1494 = vmatpush1.bf16.msra.mxu0 0
        %1495 = vmatprep.subr.bf16.mxu0 0
        %1496 = vmatpush1.bf16.msra.mxu0 0
        %1497 = vmatprep.subr.bf16.mxu0 0
        %1498 = vmatpush1.bf16.msra.mxu0 0
        %1499 = vmatprep.subr.bf16.mxu0 0
        %1500 = vmatpush1.bf16.msra.mxu0 0
        %1501 = vmatprep.subr.bf16.mxu0 0
        %1502 = vmatpush1.bf16.msra.mxu0 0
        %1503 = vmatprep.subr.bf16.mxu0 0
        %1504 = vmatpush1.bf16.msra.mxu0 0
        %1505 = vmatprep.subr.bf16.mxu0 0
        %1506 = vmatpush1.bf16.msra.mxu0 0
        %1507 = vmatprep.subr.bf16.mxu0 0
        %1508 = vmatpush1.bf16.msra.mxu0 0
        %1509 = vmatprep.subr.bf16.mxu0 0
        %1510 = vmatpush1.bf16.msra.mxu0 0
        %1511 = vmatprep.subr.bf16.mxu0 0
        %1512 = vmatpush1.bf16.msra.mxu0 0
        %1513 = vmatprep.subr.bf16.mxu0 0
        %1514 = vmatpush1.bf16.msra.mxu0 0
        %1515 = vmatprep.mubr.bf16.mxu0 0
        %1516 = vmatmul.mubr.bf16.gmra.mrb[0].mxu0 %v1481
        %v1517 = vpop.f32.mrb[0].mxu0
        %v1518 = vadd.f32 %v1466, %v1517
        %v1519 = vpop.f32.mrb[0].mxu0
        %v1520 = vpop.f32.mrb[0].mxu0
        %v1521 = vpop.f32.mrb[0].mxu0
        %1522 = vdwg.mxu0
        %v1523 = vxor.u32 %v1518, 2147483648
        %v1524 = vmul.f32 %v1523, 1.442695
        %v1525 = vpow.pop %v1524
        %v1526 = vadd.f32 %v1525, 1.0
        %v1527 = vrcp.pop %v1526
        %v1528 = vmul.f32 1.0, %v1527
        %1530 = vrot.lane.b32.xlu0 %v1528, 64
        %v1531 = vpop.permute.xlu0 %1530
        %v1533 = vmul.f32 %v1518, %v1531
        %v1534 = vpack.c.bf16 %v1533, %v1533
        %v1535 = vld [vmem:[%s651] sm:$0xf]
        %v1536 = vld [vmem:[%s651 + $0x4] sm:$0xf]
        %v1537 = vld [vmem:[%s651 + $0x8] sm:$0xf]
        %v1538 = vld [vmem:[%s651 + $0xc] sm:$0xf]
        %v1539 = vld [vmem:[%s651 + $0x10] sm:$0xf]
        %v1540 = vld [vmem:[%s651 + $0x14] sm:$0xf]
        %v1541 = vld [vmem:[%s651 + $0x18] sm:$0xf]
        %v1542 = vld [vmem:[%s651 + $0x1c] sm:$0xf]
        %v1543 = vld [vmem:[%s654] sm:$0x1]
        %v1545 = vlaneseq
        %v1546 = vshrl.u32 %v1545, 7
        %v1547 = vsub.s32 0, %v1546
        %v1548 = vrot.slane %v1543, %v1547
        %v1558 = vunpack.c.l.b16 %v1535
        %v1559 = vunpack.c.l.b16 %v1536
        %v1560 = vunpack.c.l.b16 %v1537
        %v1561 = vunpack.c.l.b16 %v1538
        %v1562 = vunpack.c.l.b16 %v1539
        %v1563 = vunpack.c.l.b16 %v1540
        %v1564 = vunpack.c.l.b16 %v1541
        %v1565 = vunpack.c.l.b16 %v1542
        %v1566 = vpack.c.b16 %v1559, %v1558
        %v1567 = vpack.c.b16 %v1561, %v1560
        %v1568 = vpack.c.b16 %v1563, %v1562
        %v1569 = vpack.c.b16 %v1565, %v1564
        %vm1574 = vcmask 523264
        %v1576 = vsel %vm1574, %v1534, 0
        %1578 = vmatprep.subr.bf16.mxu0 0
        %1579 = vmatpush1.bf16.msra.mxu0 %v1566
        %1580 = vmatprep.subr.bf16.mxu0 0
        %1581 = vmatpush1.bf16.msra.mxu0 %v1567
        %1582 = vmatprep.subr.bf16.mxu0 0
        %1583 = vmatpush1.bf16.msra.mxu0 %v1568
        %1584 = vmatprep.subr.bf16.mxu0 0
        %1585 = vmatpush1.bf16.msra.mxu0 %v1569
        %1586 = vmatprep.subr.bf16.mxu0 0
        %1587 = vmatpush1.bf16.msra.mxu0 0
        %1588 = vmatprep.subr.bf16.mxu0 0
        %1589 = vmatpush1.bf16.msra.mxu0 0
        %1590 = vmatprep.subr.bf16.mxu0 0
        %1591 = vmatpush1.bf16.msra.mxu0 0
        %1592 = vmatprep.subr.bf16.mxu0 0
        %1593 = vmatpush1.bf16.msra.mxu0 0
        %1594 = vmatprep.subr.bf16.mxu0 0
        %1595 = vmatpush1.bf16.msra.mxu0 0
        %1596 = vmatprep.subr.bf16.mxu0 0
        %1597 = vmatpush1.bf16.msra.mxu0 0
        %1598 = vmatprep.subr.bf16.mxu0 0
        %1599 = vmatpush1.bf16.msra.mxu0 0
        %1600 = vmatprep.subr.bf16.mxu0 0
        %1601 = vmatpush1.bf16.msra.mxu0 0
        %1602 = vmatprep.subr.bf16.mxu0 0
        %1603 = vmatpush1.bf16.msra.mxu0 0
        %1604 = vmatprep.subr.bf16.mxu0 0
        %1605 = vmatpush1.bf16.msra.mxu0 0
        %1606 = vmatprep.subr.bf16.mxu0 0
        %1607 = vmatpush1.bf16.msra.mxu0 0
        %1608 = vmatprep.subr.bf16.mxu0 0
        %1609 = vmatpush1.bf16.msra.mxu0 0
        %1610 = vmatprep.mubr.bf16.mxu0 0
        %1611 = vmatmul.mubr.bf16.gmra.mrb[0].mxu0 %v1576
        %v1612 = vpop.f32.mrb[0].mxu0
        %v1613 = vadd.f32 %v1548, %v1612
        %v1614 = vpop.f32.mrb[0].mxu0
        %v1615 = vpop.f32.mrb[0].mxu0
        %v1616 = vpop.f32.mrb[0].mxu0
        %1617 = vdwg.mxu0
        %v1618 = vadd.f32 %v1439, %v1613
        %1619 = vst.msk [vmem:[#allocation2] sm:$0xff] %vm666, %v1618
        %p1620 = scmp.eq.s32.totalorder %s34, 1
        // Predicated region
        $region85: #{_lambda_.1} parent=75 // pred_check
          %p1621 = pneg %p1620
        $region86: #{_lambda_.1} parent=75 // pred_check_branch
          %1623 = sbr.rel (%p1621) target = $region88
        $region87: #{_lambda_.1} parent=75 // pred_region
          %v1624 = vld [vmem:[%s3] sm:$0x1]
          %v1625 = vmul.f32 %v1618, %v1618
          %v1626 = vsel %vm666, %v1625, 0.0
          %1627 = vadd.xlane.f32.xlu0 %v1626
          %v1628 = vpop.xlane.xlu0 %1627
          %v1629 = vmul.f32 %v1628, %v670
          %v1630 = vadd.f32 %v1629, 1e-06
          %v1631 = vrsqrt.pop %v1630
          %v1632 = vmul.f32 %v1618, %v1631
          %v1634 = vlaneseq
          %v1635 = vshrl.u32 %v1634, 7
          %v1636 = vsub.s32 0, %v1635
          %v1637 = vrot.slane %v1624, %v1636
          %v1639 = vmul.f32 %v1632, %v1637
          %1640 = vst.msk [vmem:[%s611] sm:$0xff] %vm666, %v1639
        $region88: #{_lambda_.1} parent=75 // pred_fallthru
          _
        %s1641 = sand.u32 %s398, 1
        %s1642 = scalar_lea.sflag [#allocation5], %s1641
        %s1643 = sand.u32 %s398, 1
        %s1644 = smul.addr %s1643, 8
        %s1645 = scalar_lea.vmem [#allocation6], %s1644
        // Predicated region
        $region89: #{_lambda_.1} parent=75 // pred_check
          %p1646 = pneg %p408
        $region90: #{_lambda_.1} parent=75 // pred_check_branch
          %1648 = sbr.rel (%p1646) target = $region92
        $region91: #{_lambda_.1} parent=75 // pred_region
          %s1650 = ssub.s32 128, 128
          %1651 = vsyncadd %s1642, %s1650
          %s1652 = smul.addr %s33, 128
          %s1653 = scalar_lea.hbm %s14, %s1652
          %s1655 = sshll.u32 %s1645, 4
          %s1656 = int_to_ptr.vmem [resolvable:$true] %s1655
          %1658 = dma.vmem_to_hbm [thread:$0]  %s1656, 128, %s1653, %s1642
        $region92: #{_lambda_.1} parent=75 // pred_fallthru
          _
      $region76: #{_lambda_.1} parent=5 // pred_fallthru
        _
      %p1659 = scmp.le.s32.totalorder 2, %s24
      // Predicated region
      $region93: #{_lambda_.1} parent=5 // pred_check
        %p1660 = pneg %p1659
      $region94: #{_lambda_.1} parent=5 // pred_check_branch
        %1662 = sbr.rel (%p1660) target = $region96
      $region95: #{_lambda_.1} parent=5 // pred_region
        %s1663 = ssub.s32 %s24, 2
        // Predicated region
        $region97: #{_lambda_.1} parent=95 // pred_check
          %p1664 = pneg %p414
        $region98: #{_lambda_.1} parent=95 // pred_check_branch
          %1666 = sbr.rel (%p1664) target = $region100
        $region99: #{_lambda_.1} parent=95 // pred_region
          %s1667 = sand.u32 %s399, 1
          %s1668 = scalar_lea.sflag [#allocation5], %s1667
          %s1669 = sand.u32 %s399, 1
          %s1670 = smul.addr %s1669, 8
          %s1671 = scalar_lea.vmem [#allocation6], %s1670
          %1672 = dma.done %s1668, 128
        $region100: #{_lambda_.1} parent=95 // pred_fallthru
          _
      $region96: #{_lambda_.1} parent=5 // pred_fallthru
        _
    $region6: #{_lambda_.1} parent=1 // loop_footer
      %s28 = sadd.s32 1, %s24
    $region7: #{_lambda_.1} parent=1 // loop_footer_branch
      %23 = sbr.rel target = $region3
    $region8: #{_lambda_.1} parent=1 // loop_exit
      _
    %1673 = vsyncpa [#allocation4], 1
    %s1674 = scalar_lea.sflag [#allocation4], 1
    %1675 = vsyncpa %s1674, 1
    %1676 = vsyncpa [#allocation5], 1
    %s1677 = scalar_lea.sflag [#allocation5], 1
    %1678 = vsyncpa %s1677, 1

</llo_original>
